<compile_context>
chip_gen: v6e
topology: v6e:2x2x1
jax: 0.10.0
libtpu: 0.0.40
codegen_flags: <defaults>
</compile_context>

<pallas_src>
import math

import jax
import jax.numpy as jnp
from jax import lax
from jax.experimental import pallas as pl
from jax.experimental.pallas import tpu as pltpu

# ---------------- configuration (small, CLIP-text-like) ----------------
B, S, D = 2, 8, 32          # batch, context length, transformer width
H = 4                       # attention heads
DH = D // H                 # head dim (8)
L = 2                       # transformer layers
E = 16                      # text_projection output dim
FF = 4 * D                  # MLP hidden dim (128)
OUT_PAD = 128               # lane-dense padded output width (>= E)
HS = H * S                  # 32: all (head, position) columns for one batch
NEG_INF = -1e9
LN_EPS = 1e-5

# ---- bf16 weight-slab row layout (all offsets multiples of 16 for bf16 packing) ----
PER_LAYER_W = 5 * D + FF            # wq,wk,wv,wo (4*D) + wfc (D) + wcp (FF) = 288
TPROJ_ROW = L * PER_LAYER_W         # 576
JV_ROW = TPROJ_ROW + D              # 608  replicate-eye (HS, S)
GS_ROW = JV_ROW + HS                # 640  segment-sum   (HS, HS)
W_ROWS = GS_ROW + HS                # 672

# ---- f32 constants/bias slab row layout ----
POS_ROW = 0                         # positional embedding (S, D)
CAUSAL_ROW = POS_ROW + S            # 8   additive causal mask (S, HS)
MASKV_ROW = CAUSAL_ROW + S          # 16  head block-diag mask (HS, D)
BIAS_ROW = MASKV_ROW + HS           # 48  8 rows per layer: bq,bk,bv,bo,bfc,bcp
TBIAS_ROW = BIAS_ROW + 8 * L        # 64  folded ln_final bias @ tproj (1, OUT_PAD)
F_ROWS = TBIAS_ROW + 8              # 72


def _norm(x):
    """LayerNorm without affine (gamma/beta folded into the next matmul)."""
    mu = jnp.mean(x, axis=-1, keepdims=True)
    var = jnp.mean(jnp.square(x - mu), axis=-1, keepdims=True)
    return (x - mu) * lax.rsqrt(var + LN_EPS)


def _layer_norm(x, g, b):
    return _norm(x) * g + b


def _quick_gelu(x):
    # CLIP uses QuickGELU: x * sigmoid(1.702 * x)
    return x * jax.nn.sigmoid(1.702 * x)


# ---------------- Pallas kernel (one batch element per grid step) ----------------
def text_encoder_kernel(eot_ref, x_ref, wslab_ref, fslab_ref, out_ref):
    f32 = jnp.float32
    cd = wslab_ref.dtype                                     # bf16 MXU operand dtype

    # loop-invariant constants, precomputed at pack time (no in-kernel iota math)
    pos = fslab_ref[POS_ROW:POS_ROW + S, 0:D]                # (S, D)
    causal = fslab_ref[CAUSAL_ROW:CAUSAL_ROW + S, 0:HS]      # (S, HS) additive mask
    mask_v = fslab_ref[MASKV_ROW:MASKV_ROW + HS, 0:D]        # (HS, D) head block-diag
    jv = wslab_ref[JV_ROW:JV_ROW + HS, 0:S]                  # (HS, S) replicate-eye
    gs = wslab_ref[GS_ROW:GS_ROW + HS, 0:HS]                 # (HS, HS) segment sums

    x = x_ref[0] + pos                                       # (S, D) f32 residual stream

    for l in range(L):   # TODO(synk): move to a grid axis / fori_loop if L grows past ~4
        base = l * PER_LAYER_W
        br = BIAS_ROW + 8 * l
        wq = wslab_ref[base:base + D, 0:D]
        wk = wslab_ref[base + D:base + 2 * D, 0:D]
        wv = wslab_ref[base + 2 * D:base + 3 * D, 0:D]
        wo = wslab_ref[base + 3 * D:base + 4 * D, 0:D]
        wfc = wslab_ref[base + 4 * D:base + 5 * D, 0:FF]
        wcp = wslab_ref[base + 5 * D:base + 5 * D + FF, 0:D]
        bq = fslab_ref[br + 0:br + 1, 0:D]
        bk = fslab_ref[br + 1:br + 2, 0:D]
        bv = fslab_ref[br + 2:br + 3, 0:D]
        bo = fslab_ref[br + 3:br + 4, 0:D]
        bfc = fslab_ref[br + 4:br + 5, 0:FF]
        bcp = fslab_ref[br + 5:br + 6, 0:D]

        # ---- attention (ln_1 affine and 1/sqrt(DH) folded into wq/wk/wv, bq) ----
        n1 = _norm(x).astype(cd)
        q = (jnp.dot(n1, wq, preferred_element_type=f32) + bq).astype(cd)
        k = (jnp.dot(n1, wk, preferred_element_type=f32) + bk).astype(cd)
        v = (jnp.dot(n1, wv, preferred_element_type=f32) + bv).astype(cd)

        # head-block-diagonal K/V replicas built on the MXU (no transpose/concat):
        #   krep[h*S + j, d] = k[j, d] if d in head h else 0   (same for v)
        krep = (jnp.dot(jv, k, preferred_element_type=f32) * mask_v).astype(cd)
        vrep = (jnp.dot(jv, v, preferred_element_type=f32) * mask_v).astype(cd)

        # scores for all heads in one lane-dense NT matmul: s[i, h*S + j]
        s = lax.dot_general(q, krep, (((1,), (1,)), ((), ())),
                            preferred_element_type=f32) + causal        # (S, HS)
        m = jnp.max(s, axis=-1, keepdims=True)                          # row-global max
        e = jnp.exp(s - m)
        denom = jnp.dot(e.astype(cd), gs, preferred_element_type=f32)   # per-head sums
        # guard: if one head's scores all underflow vs the row max, denom would be 0
        # and the approx reciprocal would yield 0 * inf = NaN.
        p = e * pl.reciprocal(jnp.maximum(denom, 1e-20), approx=True)
        ctx = jnp.dot(p.astype(cd), vrep, preferred_element_type=f32)   # (S, D)
        attn = jnp.dot(ctx.astype(cd), wo, preferred_element_type=f32) + bo
        x = x + attn

        # ---- MLP (ln_2 affine folded into wfc / bfc) ----
        n2 = _norm(x).astype(cd)
        hmid = _quick_gelu(jnp.dot(n2, wfc, preferred_element_type=f32) + bfc)
        x = x + jnp.dot(hmid.astype(cd), wcp, preferred_element_type=f32) + bcp

    # ---- ln_final (affine folded into tproj/tbias), EOT pooling, projection ----
    nf = _norm(x).astype(cd)                                  # (S, D)
    eot = eot_ref[pl.program_id(0)]                           # scalar from SMEM prefetch
    onehot = (lax.broadcasted_iota(jnp.int32, (1, S), 1) == eot).astype(cd)
    pooled = jnp.dot(onehot, nf, preferred_element_type=f32)  # (1, D)
    tproj = wslab_ref[TPROJ_ROW:TPROJ_ROW + D, 0:OUT_PAD]
    tbias = fslab_ref[TBIAS_ROW:TBIAS_ROW + 1, 0:OUT_PAD]
    out = jnp.dot(pooled.astype(cd), tproj, preferred_element_type=f32) + tbias
    out_ref[0] = out.astype(out_ref.dtype)


# ---------------- wrapper ----------------
def _cost_estimate():
    per_layer = (3 * 2 * S * D * D          # q/k/v projections
                 + 2 * 2 * HS * S * D       # krep / vrep builds
                 + 2 * S * HS * D           # scores
                 + 2 * S * HS * HS          # grouped denominator
                 + 2 * S * HS * D           # ctx
                 + 2 * S * D * D            # out projection
                 + 2 * 2 * S * D * FF)      # MLP
    flops = B * (L * per_layer + 2 * S * D + 2 * D * OUT_PAD)
    transcendentals = B * (L * (S * HS + S * FF) + S * D)
    bytes_accessed = (B * S * D * 4 + W_ROWS * 128 * 2 + F_ROWS * 128 * 4
                      + B * OUT_PAD * 4)
    return pl.CostEstimate(flops=flops, transcendentals=transcendentals,
                           bytes_accessed=bytes_accessed)


def text_encoder(prompts, tokenized_prompts, packed):
    # EOT index computed outside the kernel; delivered via SMEM scalar prefetch
    # (no one-hot selector DMA, the pooling matmul's one-hot is built in-kernel).
    eot = jnp.argmax(tokenized_prompts, axis=-1).astype(jnp.int32)     # (B,)

    grid_spec = pltpu.PrefetchScalarGridSpec(
        num_scalar_prefetch=1,
        grid=(B,),
        in_specs=[
            pl.BlockSpec((1, S, D), lambda b, eot_ref: (b, 0, 0)),      # prompts
            pl.BlockSpec((W_ROWS, 128), lambda b, eot_ref: (0, 0)),     # bf16 weights
            pl.BlockSpec((F_ROWS, 128), lambda b, eot_ref: (0, 0)),     # f32 constants
        ],
        out_specs=pl.BlockSpec((1, 1, OUT_PAD), lambda b, eot_ref: (b, 0, 0)),
    )
    out = pl.pallas_call(
        text_encoder_kernel,
        out_shape=jax.ShapeDtypeStruct((B, 1, OUT_PAD), jnp.float32),
        grid_spec=grid_spec,
        compiler_params=pltpu.CompilerParams(
            dimension_semantics=("parallel",),       # splits batch across v7x's 2 TCs
            vmem_limit_bytes=32 * 1024 * 1024,
        ),
        cost_estimate=_cost_estimate(),
    )(eot, prompts, packed["wslab"], packed["fslab"])
    return out.reshape(B, OUT_PAD)[:, :E]


# ---------------- parameter init (PyTorch layout) + packing ----------------
def init_raw_params(key):
    ks = jax.random.split(key, 16)

    def nrm(k, shape, scale=0.02):
        return (scale * jax.random.normal(k, shape)).astype(jnp.float32)

    return {
        "in_w": nrm(ks[0], (L, 3 * D, D)),   # MultiheadAttention.in_proj_weight
        "in_b": nrm(ks[1], (L, 3 * D)),
        "out_w": nrm(ks[2], (L, D, D)),      # out_proj.weight
        "out_b": nrm(ks[3], (L, D)),
        "fc_w": nrm(ks[4], (L, FF, D)),      # mlp.c_fc.weight
        "fc_b": nrm(ks[5], (L, FF)),
        "cp_w": nrm(ks[6], (L, D, FF)),      # mlp.c_proj.weight
        "cp_b": nrm(ks[7], (L, D)),
        "pos": nrm(ks[8], (S, D), 0.01),     # positional_embedding
        "tproj": nrm(ks[9], (D, E)),         # text_projection
        "ln1_g": (1.0 + 0.1 * jax.random.normal(ks[10], (L, D))).astype(jnp.float32),
        "ln1_b": (0.05 * jax.random.normal(ks[11], (L, D))).astype(jnp.float32),
        "ln2_g": (1.0 + 0.1 * jax.random.normal(ks[12], (L, D))).astype(jnp.float32),
        "ln2_b": (0.05 * jax.random.normal(ks[13], (L, D))).astype(jnp.float32),
        "lnf_g": (1.0 + 0.1 * jax.random.normal(ks[14], (D,))).astype(jnp.float32),
        "lnf_b": (0.05 * jax.random.normal(ks[15], (D,))).astype(jnp.float32),
    }


def pack_params(raw, compute_dtype=jnp.bfloat16):
    """Fold LN affines + attention scale into projections, precompute all masks,
    and pack everything into one bf16 weight slab + one f32 constants slab."""
    scale = 1.0 / math.sqrt(DH)
    w = jnp.zeros((W_ROWS, 128), jnp.float32)
    f = jnp.zeros((F_ROWS, 128), jnp.float32)

    for l in range(L):
        base = l * PER_LAYER_W
        br = BIAS_ROW + 8 * l
        g1, b1 = raw["ln1_g"][l], raw["ln1_b"][l]
        w_in, b_in = raw["in_w"][l], raw["in_b"][l]           # (3D, D), (3D,)
        w_eff = (w_in * g1[None, :]).T                        # (D, 3D): ln_1 folded
        b_eff = w_in @ b1 + b_in                              # (3D,)
        g2, b2 = raw["ln2_g"][l], raw["ln2_b"][l]

        w = w.at[base:base + D, 0:D].set(w_eff[:, 0:D] * scale)          # wq (scaled)
        w = w.at[base + D:base + 2 * D, 0:D].set(w_eff[:, D:2 * D])      # wk
        w = w.at[base + 2 * D:base + 3 * D, 0:D].set(w_eff[:, 2 * D:])   # wv
        w = w.at[base + 3 * D:base + 4 * D, 0:D].set(raw["out_w"][l].T)  # wo
        w = w.at[base + 4 * D:base + 5 * D, 0:FF].set(
            (raw["fc_w"][l] * g2[None, :]).T)                            # wfc (ln_2 folded)
        w = w.at[base + 5 * D:base + 5 * D + FF, 0:D].set(raw["cp_w"][l].T)

        f = f.at[br + 0, 0:D].set(b_eff[0:D] * scale)                    # bq (scaled)
        f = f.at[br + 1, 0:D].set(b_eff[D:2 * D])                        # bk
        f = f.at[br + 2, 0:D].set(b_eff[2 * D:3 * D])                    # bv
        f = f.at[br + 3, 0:D].set(raw["out_b"][l])                       # bo
        f = f.at[br + 4, 0:FF].set(raw["fc_w"][l] @ b2 + raw["fc_b"][l])  # bfc
        f = f.at[br + 5, 0:D].set(raw["cp_b"][l])                        # bcp

    # ln_final affine folded into a lane-padded text projection.
    tpad = jnp.zeros((D, OUT_PAD), jnp.float32).at[:, :E].set(raw["tproj"])
    w = w.at[TPROJ_ROW:TPROJ_ROW + D, 0:OUT_PAD].set(raw["lnf_g"][:, None] * tpad)
    f = f.at[TBIAS_ROW, 0:OUT_PAD].set(raw["lnf_b"] @ tpad)

    # constant MXU operands (0/1, exact in bf16)
    rr = jnp.arange(HS)
    jv = (rr[:, None] % S == jnp.arange(S)[None, :]).astype(jnp.float32)   # (HS, S)
    gs = (rr[:, None] // S == rr[None, :] // S).astype(jnp.float32)        # (HS, HS)
    w = w.at[JV_ROW:JV_ROW + HS, 0:S].set(jv)
    w = w.at[GS_ROW:GS_ROW + HS, 0:HS].set(gs)

    # f32 constants: positional rows, causal add-mask, head block-diag mask
    f = f.at[POS_ROW:POS_ROW + S, 0:D].set(raw["pos"])
    causal = jnp.where(rr[None, :] % S <= jnp.arange(S)[:, None],
                       0.0, NEG_INF).astype(jnp.float32)                   # (S, HS)
    mask_v = (rr[:, None] // S == jnp.arange(D)[None, :] // DH).astype(jnp.float32)
    f = f.at[CAUSAL_ROW:CAUSAL_ROW + S, 0:HS].set(causal)
    f = f.at[MASKV_ROW:MASKV_ROW + HS, 0:D].set(mask_v)

    return {"wslab": w.astype(compute_dtype), "fslab": f}


# ---------------- faithful unfolded f32 reference (mirrors the PyTorch module) ----
def reference_forward(prompts, tok, raw):
    scale = 1.0 / math.sqrt(DH)
    rows = lax.broadcasted_iota(jnp.int32, (S, S), 0)
    cols = lax.broadcasted_iota(jnp.int32, (S, S), 1)
    causal = jnp.where(cols <= rows, 0.0, NEG_INF).astype(jnp.float32)

    x = prompts + raw["pos"][None]
    for l in range(L):
        h = _layer_norm(x, raw["ln1_g"][l], raw["ln1_b"][l])
        qkv = jnp.einsum('bsd,od->bso', h, raw["in_w"][l]) + raw["in_b"][l]
        q, k, v = jnp.split(qkv, 3, axis=-1)

        def heads(t):
            return t.reshape(B, S, H, DH).transpose(0, 2, 1, 3)

        qh, kh, vh = heads(q), heads(k), heads(v)
        s = jnp.einsum('bhqe,bhke->bhqk', qh, kh) * scale + causal[None, None]
        p = jax.nn.softmax(s, axis=-1)
        ctx = jnp.einsum('bhqk,bhke->bhqe', p, vh)
        ctx = ctx.transpose(0, 2, 1, 3).reshape(B, S, D)
        x = x + jnp.einsum('bsd,od->bso', ctx, raw["out_w"][l]) + raw["out_b"][l]

        h = _layer_norm(x, raw["ln2_g"][l], raw["ln2_b"][l])
        h = _quick_gelu(jnp.einsum('bsd,fd->bsf', h, raw["fc_w"][l]) + raw["fc_b"][l])
        x = x + jnp.einsum('bsf,df->bsd', h, raw["cp_w"][l]) + raw["cp_b"][l]

    x = _layer_norm(x, raw["lnf_g"], raw["lnf_b"])
    eot = jnp.argmax(tok, axis=-1)
    pooled = x[jnp.arange(B), eot]
    return pooled @ raw["tproj"]


if __name__ == "__main__":
    key = jax.random.PRNGKey(0)
    k_p, k_t, k_w = jax.random.split(key, 3)
    prompts = (0.5 * jax.random.normal(k_p, (B, S, D))).astype(jnp.float32)
    tokenized_prompts = jax.random.randint(k_t, (B, S), 0, 1000, dtype=jnp.int32)

    raw = init_raw_params(k_w)
    packed = pack_params(raw)

    out = jax.jit(text_encoder)(prompts, tokenized_prompts, packed)
    out = jax.block_until_ready(out)
    assert out.shape == (B, E)
    assert bool(jnp.all(jnp.isfinite(out)))

    ref = jax.jit(reference_forward)(prompts, tokenized_prompts, raw)
    tol = 2e-2   # bf16 MXU operands vs f32 reference
    err = float(jnp.max(jnp.abs(out - ref)))
    assert jnp.allclose(out, ref, atol=tol, rtol=tol), f"max abs err {err}"
    print("KERNEL_OK")
</pallas_src>

<mosaic_0001>
module attributes {stable_mosaic.version = 11 : i64} {
  func.func @text_encoder_kernel(%arg0: i32, %arg1: memref<2xi32, #tpu.memory_space<smem>>, %arg2: memref<1x8x32xf32, #tpu.memory_space<vmem>>, %arg3: memref<672x128xbf16, #tpu.memory_space<vmem>>, %arg4: memref<72x128xf32, #tpu.memory_space<vmem>>, %arg5: memref<1x1x128xf32, #tpu.memory_space<vmem>>) attributes {dimension_semantics = [#tpu.dimension_semantics<parallel>], iteration_bounds = array<i64: 2>, scalar_prefetch = 1 : i64, scratch_operands = 0 : i64, tpu.core_type = #tpu.core_type<tc>, window_params = [{transform_indices = @transform_0, window_bounds = array<i64: 1, 8, 32>}, {pipeline_mode = #tpu.pipeline_mode<synchronous>, transform_indices = @transform_1, window_bounds = array<i64: 672, 128>}, {pipeline_mode = #tpu.pipeline_mode<synchronous>, transform_indices = @transform_2, window_bounds = array<i64: 72, 128>}, {transform_indices = @transform_3, window_bounds = array<i64: 1, 1, 128>}]} {
    %c0 = arith.constant 0 : index
    %c0_0 = arith.constant 0 : index
    %0 = vector.load %arg4[%c0, %c0_0] : memref<72x128xf32, #tpu.memory_space<vmem>>, vector<8x32xf32>
    %c8 = arith.constant 8 : index
    %c0_1 = arith.constant 0 : index
    %1 = vector.load %arg4[%c8, %c0_1] : memref<72x128xf32, #tpu.memory_space<vmem>>, vector<8x32xf32>
    %c16 = arith.constant 16 : index
    %c0_2 = arith.constant 0 : index
    %2 = vector.load %arg4[%c16, %c0_2] : memref<72x128xf32, #tpu.memory_space<vmem>>, vector<32x32xf32>
    %c608 = arith.constant 608 : index
    %c0_3 = arith.constant 0 : index
    %3 = vector.load %arg3[%c608, %c0_3] : memref<672x128xbf16, #tpu.memory_space<vmem>>, vector<32x8xbf16>
    %c640 = arith.constant 640 : index
    %c0_4 = arith.constant 0 : index
    %4 = vector.load %arg3[%c640, %c0_4] : memref<672x128xbf16, #tpu.memory_space<vmem>>, vector<32x32xbf16>
    %c0_5 = arith.constant 0 : index
    %c0_6 = arith.constant 0 : index
    %c0_7 = arith.constant 0 : index
    %5 = vector.load %arg2[%c0_5, %c0_6, %c0_7] : memref<1x8x32xf32, #tpu.memory_space<vmem>>, vector<1x8x32xf32>
    %6 = vector.shape_cast %5 : vector<1x8x32xf32> to vector<8x32xf32>
    %7 = arith.addf %6, %0 : vector<8x32xf32>
    %c0_8 = arith.constant 0 : index
    %c0_9 = arith.constant 0 : index
    %8 = vector.load %arg3[%c0_8, %c0_9] : memref<672x128xbf16, #tpu.memory_space<vmem>>, vector<32x32xbf16>
    %c32 = arith.constant 32 : index
    %c0_10 = arith.constant 0 : index
    %9 = vector.load %arg3[%c32, %c0_10] : memref<672x128xbf16, #tpu.memory_space<vmem>>, vector<32x32xbf16>
    %c64 = arith.constant 64 : index
    %c0_11 = arith.constant 0 : index
    %10 = vector.load %arg3[%c64, %c0_11] : memref<672x128xbf16, #tpu.memory_space<vmem>>, vector<32x32xbf16>
    %c96 = arith.constant 96 : index
    %c0_12 = arith.constant 0 : index
    %11 = vector.load %arg3[%c96, %c0_12] : memref<672x128xbf16, #tpu.memory_space<vmem>>, vector<32x32xbf16>
    %c128 = arith.constant 128 : index
    %c0_13 = arith.constant 0 : index
    %12 = vector.load %arg3[%c128, %c0_13] : memref<672x128xbf16, #tpu.memory_space<vmem>>, vector<32x128xbf16>
    %c160 = arith.constant 160 : index
    %c0_14 = arith.constant 0 : index
    %13 = vector.load %arg3[%c160, %c0_14] : memref<672x128xbf16, #tpu.memory_space<vmem>>, vector<128x32xbf16>
    %c48 = arith.constant 48 : index
    %c0_15 = arith.constant 0 : index
    %14 = vector.load %arg4[%c48, %c0_15] : memref<72x128xf32, #tpu.memory_space<vmem>>, vector<1x32xf32>
    %c49 = arith.constant 49 : index
    %c0_16 = arith.constant 0 : index
    %15 = vector.load %arg4[%c49, %c0_16] : memref<72x128xf32, #tpu.memory_space<vmem>>, vector<1x32xf32>
    %c50 = arith.constant 50 : index
    %c0_17 = arith.constant 0 : index
    %16 = vector.load %arg4[%c50, %c0_17] : memref<72x128xf32, #tpu.memory_space<vmem>>, vector<1x32xf32>
    %c51 = arith.constant 51 : index
    %c0_18 = arith.constant 0 : index
    %17 = vector.load %arg4[%c51, %c0_18] : memref<72x128xf32, #tpu.memory_space<vmem>>, vector<1x32xf32>
    %c52 = arith.constant 52 : index
    %c0_19 = arith.constant 0 : index
    %18 = vector.load %arg4[%c52, %c0_19] : memref<72x128xf32, #tpu.memory_space<vmem>>, vector<1x128xf32>
    %c53 = arith.constant 53 : index
    %c0_20 = arith.constant 0 : index
    %19 = vector.load %arg4[%c53, %c0_20] : memref<72x128xf32, #tpu.memory_space<vmem>>, vector<1x32xf32>
    %cst = arith.constant dense<0.000000e+00> : vector<8xf32>
    %20 = vector.multi_reduction <add>, %7, %cst [1] : vector<8x32xf32> to vector<8xf32>
    %21 = vector.shape_cast %20 : vector<8xf32> to vector<8x1xf32>
    %cst_21 = arith.constant 3.200000e+01 : f32
    %22 = vector.broadcast %cst_21 : f32 to vector<8x1xf32>
    %23 = arith.divf %21, %22 : vector<8x1xf32>
    %24 = vector.broadcast %23 : vector<8x1xf32> to vector<8x32xf32>
    %25 = arith.subf %7, %24 : vector<8x32xf32>
    %26 = arith.mulf %25, %25 : vector<8x32xf32>
    %cst_22 = arith.constant dense<0.000000e+00> : vector<8xf32>
    %27 = vector.multi_reduction <add>, %26, %cst_22 [1] : vector<8x32xf32> to vector<8xf32>
    %28 = vector.shape_cast %27 : vector<8xf32> to vector<8x1xf32>
    %cst_23 = arith.constant 3.200000e+01 : f32
    %29 = vector.broadcast %cst_23 : f32 to vector<8x1xf32>
    %30 = arith.divf %28, %29 : vector<8x1xf32>
    %31 = vector.broadcast %23 : vector<8x1xf32> to vector<8x32xf32>
    %32 = arith.subf %7, %31 : vector<8x32xf32>
    %cst_24 = arith.constant 9.99999974E-6 : f32
    %33 = vector.broadcast %cst_24 : f32 to vector<8x1xf32>
    %34 = arith.addf %30, %33 : vector<8x1xf32>
    %35 = math.rsqrt %34 : vector<8x1xf32>
    %36 = vector.broadcast %35 : vector<8x1xf32> to vector<8x32xf32>
    %37 = arith.mulf %32, %36 : vector<8x32xf32>
    %38 = arith.truncf %37 : vector<8x32xf32> to vector<8x32xbf16>
    %cst_25 = arith.constant dense<0.000000e+00> : vector<8x32xf32>
    %39 = tpu.matmul %38, %8, %cst_25 {dimension_numbers = #tpu.dot_dimension_numbers<[1], [0], [0], [1], [0, 0, 1, 1], [], []>} : vector<8x32xbf16>, vector<32x32xbf16>, vector<8x32xf32> -> vector<8x32xf32>
    %40 = vector.broadcast %14 : vector<1x32xf32> to vector<8x32xf32>
    %41 = arith.addf %39, %40 : vector<8x32xf32>
    %42 = arith.truncf %41 : vector<8x32xf32> to vector<8x32xbf16>
    %cst_26 = arith.constant dense<0.000000e+00> : vector<8x32xf32>
    %43 = tpu.matmul %38, %9, %cst_26 {dimension_numbers = #tpu.dot_dimension_numbers<[1], [0], [0], [1], [0, 0, 1, 1], [], []>} : vector<8x32xbf16>, vector<32x32xbf16>, vector<8x32xf32> -> vector<8x32xf32>
    %44 = vector.broadcast %15 : vector<1x32xf32> to vector<8x32xf32>
    %45 = arith.addf %43, %44 : vector<8x32xf32>
    %46 = arith.truncf %45 : vector<8x32xf32> to vector<8x32xbf16>
    %cst_27 = arith.constant dense<0.000000e+00> : vector<8x32xf32>
    %47 = tpu.matmul %38, %10, %cst_27 {dimension_numbers = #tpu.dot_dimension_numbers<[1], [0], [0], [1], [0, 0, 1, 1], [], []>} : vector<8x32xbf16>, vector<32x32xbf16>, vector<8x32xf32> -> vector<8x32xf32>
    %48 = vector.broadcast %16 : vector<1x32xf32> to vector<8x32xf32>
    %49 = arith.addf %47, %48 : vector<8x32xf32>
    %50 = arith.truncf %49 : vector<8x32xf32> to vector<8x32xbf16>
    %cst_28 = arith.constant dense<0.000000e+00> : vector<32x32xf32>
    %51 = tpu.matmul %3, %46, %cst_28 {dimension_numbers = #tpu.dot_dimension_numbers<[1], [0], [0], [1], [0, 0, 1, 1], [], []>} : vector<32x8xbf16>, vector<8x32xbf16>, vector<32x32xf32> -> vector<32x32xf32>
    %52 = arith.mulf %51, %2 : vector<32x32xf32>
    %53 = arith.truncf %52 : vector<32x32xf32> to vector<32x32xbf16>
    %cst_29 = arith.constant dense<0.000000e+00> : vector<32x32xf32>
    %54 = tpu.matmul %3, %50, %cst_29 {dimension_numbers = #tpu.dot_dimension_numbers<[1], [0], [0], [1], [0, 0, 1, 1], [], []>} : vector<32x8xbf16>, vector<8x32xbf16>, vector<32x32xf32> -> vector<32x32xf32>
    %55 = arith.mulf %54, %2 : vector<32x32xf32>
    %56 = arith.truncf %55 : vector<32x32xf32> to vector<32x32xbf16>
    %cst_30 = arith.constant dense<0.000000e+00> : vector<8x32xf32>
    %57 = tpu.matmul %42, %53, %cst_30 {dimension_numbers = #tpu.dot_dimension_numbers<[1], [1], [0], [0], [0, 0, 1, 0], [], []>} : vector<8x32xbf16>, vector<32x32xbf16>, vector<8x32xf32> -> vector<8x32xf32>
    %58 = arith.addf %57, %1 : vector<8x32xf32>
    %cst_31 = arith.constant dense<0xFF800000> : vector<8xf32>
    %59 = vector.multi_reduction <maximumf>, %58, %cst_31 [1] : vector<8x32xf32> to vector<8xf32>
    %60 = vector.shape_cast %59 : vector<8xf32> to vector<8x1xf32>
    %61 = vector.broadcast %60 : vector<8x1xf32> to vector<8x32xf32>
    %62 = arith.subf %58, %61 : vector<8x32xf32>
    %63 = math.exp %62 : vector<8x32xf32>
    %64 = arith.truncf %63 : vector<8x32xf32> to vector<8x32xbf16>
    %cst_32 = arith.constant dense<0.000000e+00> : vector<8x32xf32>
    %65 = tpu.matmul %64, %4, %cst_32 {dimension_numbers = #tpu.dot_dimension_numbers<[1], [0], [0], [1], [0, 0, 1, 1], [], []>} : vector<8x32xbf16>, vector<32x32xbf16>, vector<8x32xf32> -> vector<8x32xf32>
    %cst_33 = arith.constant 9.99999968E-21 : f32
    %66 = vector.broadcast %cst_33 : f32 to vector<8x32xf32>
    %67 = arith.maximumf %65, %66 : vector<8x32xf32>
    %68 = tpu.reciprocal %67 {approx = true} : vector<8x32xf32> -> vector<8x32xf32>
    %69 = arith.mulf %63, %68 : vector<8x32xf32>
    %70 = arith.truncf %69 : vector<8x32xf32> to vector<8x32xbf16>
    %cst_34 = arith.constant dense<0.000000e+00> : vector<8x32xf32>
    %71 = tpu.matmul %70, %56, %cst_34 {dimension_numbers = #tpu.dot_dimension_numbers<[1], [0], [0], [1], [0, 0, 1, 1], [], []>} : vector<8x32xbf16>, vector<32x32xbf16>, vector<8x32xf32> -> vector<8x32xf32>
    %72 = arith.truncf %71 : vector<8x32xf32> to vector<8x32xbf16>
    %cst_35 = arith.constant dense<0.000000e+00> : vector<8x32xf32>
    %73 = tpu.matmul %72, %11, %cst_35 {dimension_numbers = #tpu.dot_dimension_numbers<[1], [0], [0], [1], [0, 0, 1, 1], [], []>} : vector<8x32xbf16>, vector<32x32xbf16>, vector<8x32xf32> -> vector<8x32xf32>
    %74 = vector.broadcast %17 : vector<1x32xf32> to vector<8x32xf32>
    %75 = arith.addf %73, %74 : vector<8x32xf32>
    %76 = arith.addf %7, %75 : vector<8x32xf32>
    %cst_36 = arith.constant dense<0.000000e+00> : vector<8xf32>
    %77 = vector.multi_reduction <add>, %76, %cst_36 [1] : vector<8x32xf32> to vector<8xf32>
    %78 = vector.shape_cast %77 : vector<8xf32> to vector<8x1xf32>
    %cst_37 = arith.constant 3.200000e+01 : f32
    %79 = vector.broadcast %cst_37 : f32 to vector<8x1xf32>
    %80 = arith.divf %78, %79 : vector<8x1xf32>
    %81 = vector.broadcast %80 : vector<8x1xf32> to vector<8x32xf32>
    %82 = arith.subf %76, %81 : vector<8x32xf32>
    %83 = arith.mulf %82, %82 : vector<8x32xf32>
    %cst_38 = arith.constant dense<0.000000e+00> : vector<8xf32>
    %84 = vector.multi_reduction <add>, %83, %cst_38 [1] : vector<8x32xf32> to vector<8xf32>
    %85 = vector.shape_cast %84 : vector<8xf32> to vector<8x1xf32>
    %cst_39 = arith.constant 3.200000e+01 : f32
    %86 = vector.broadcast %cst_39 : f32 to vector<8x1xf32>
    %87 = arith.divf %85, %86 : vector<8x1xf32>
    %88 = vector.broadcast %80 : vector<8x1xf32> to vector<8x32xf32>
    %89 = arith.subf %76, %88 : vector<8x32xf32>
    %cst_40 = arith.constant 9.99999974E-6 : f32
    %90 = vector.broadcast %cst_40 : f32 to vector<8x1xf32>
    %91 = arith.addf %87, %90 : vector<8x1xf32>
    %92 = math.rsqrt %91 : vector<8x1xf32>
    %93 = vector.broadcast %92 : vector<8x1xf32> to vector<8x32xf32>
    %94 = arith.mulf %89, %93 : vector<8x32xf32>
    %95 = arith.truncf %94 : vector<8x32xf32> to vector<8x32xbf16>
    %cst_41 = arith.constant dense<0.000000e+00> : vector<8x128xf32>
    %96 = tpu.matmul %95, %12, %cst_41 {dimension_numbers = #tpu.dot_dimension_numbers<[1], [0], [0], [1], [0, 0, 1, 1], [], []>} : vector<8x32xbf16>, vector<32x128xbf16>, vector<8x128xf32> -> vector<8x128xf32>
    %97 = vector.broadcast %18 : vector<1x128xf32> to vector<8x128xf32>
    %98 = arith.addf %96, %97 : vector<8x128xf32>
    %cst_42 = arith.constant 1.702000e+00 : f32
    %99 = vector.broadcast %cst_42 : f32 to vector<8x128xf32>
    %100 = arith.mulf %99, %98 : vector<8x128xf32>
    %101 = arith.negf %100 : vector<8x128xf32>
    %102 = math.exp %101 : vector<8x128xf32>
    %cst_43 = arith.constant 1.000000e+00 : f32
    %103 = vector.broadcast %cst_43 : f32 to vector<8x128xf32>
    %104 = arith.addf %103, %102 : vector<8x128xf32>
    %105 = arith.divf %103, %104 : vector<8x128xf32>
    %106 = arith.mulf %98, %105 : vector<8x128xf32>
    %107 = arith.truncf %106 : vector<8x128xf32> to vector<8x128xbf16>
    %cst_44 = arith.constant dense<0.000000e+00> : vector<8x32xf32>
    %108 = tpu.matmul %107, %13, %cst_44 {dimension_numbers = #tpu.dot_dimension_numbers<[1], [0], [0], [1], [0, 0, 1, 1], [], []>} : vector<8x128xbf16>, vector<128x32xbf16>, vector<8x32xf32> -> vector<8x32xf32>
    %109 = arith.addf %76, %108 : vector<8x32xf32>
    %110 = vector.broadcast %19 : vector<1x32xf32> to vector<8x32xf32>
    %111 = arith.addf %109, %110 : vector<8x32xf32>
    %c288 = arith.constant 288 : index
    %c0_45 = arith.constant 0 : index
    %112 = vector.load %arg3[%c288, %c0_45] : memref<672x128xbf16, #tpu.memory_space<vmem>>, vector<32x32xbf16>
    %c320 = arith.constant 320 : index
    %c0_46 = arith.constant 0 : index
    %113 = vector.load %arg3[%c320, %c0_46] : memref<672x128xbf16, #tpu.memory_space<vmem>>, vector<32x32xbf16>
    %c352 = arith.constant 352 : index
    %c0_47 = arith.constant 0 : index
    %114 = vector.load %arg3[%c352, %c0_47] : memref<672x128xbf16, #tpu.memory_space<vmem>>, vector<32x32xbf16>
    %c384 = arith.constant 384 : index
    %c0_48 = arith.constant 0 : index
    %115 = vector.load %arg3[%c384, %c0_48] : memref<672x128xbf16, #tpu.memory_space<vmem>>, vector<32x32xbf16>
    %c416 = arith.constant 416 : index
    %c0_49 = arith.constant 0 : index
    %116 = vector.load %arg3[%c416, %c0_49] : memref<672x128xbf16, #tpu.memory_space<vmem>>, vector<32x128xbf16>
    %c448 = arith.constant 448 : index
    %c0_50 = arith.constant 0 : index
    %117 = vector.load %arg3[%c448, %c0_50] : memref<672x128xbf16, #tpu.memory_space<vmem>>, vector<128x32xbf16>
    %c56 = arith.constant 56 : index
    %c0_51 = arith.constant 0 : index
    %118 = vector.load %arg4[%c56, %c0_51] : memref<72x128xf32, #tpu.memory_space<vmem>>, vector<1x32xf32>
    %c57 = arith.constant 57 : index
    %c0_52 = arith.constant 0 : index
    %119 = vector.load %arg4[%c57, %c0_52] : memref<72x128xf32, #tpu.memory_space<vmem>>, vector<1x32xf32>
    %c58 = arith.constant 58 : index
    %c0_53 = arith.constant 0 : index
    %120 = vector.load %arg4[%c58, %c0_53] : memref<72x128xf32, #tpu.memory_space<vmem>>, vector<1x32xf32>
    %c59 = arith.constant 59 : index
    %c0_54 = arith.constant 0 : index
    %121 = vector.load %arg4[%c59, %c0_54] : memref<72x128xf32, #tpu.memory_space<vmem>>, vector<1x32xf32>
    %c60 = arith.constant 60 : index
    %c0_55 = arith.constant 0 : index
    %122 = vector.load %arg4[%c60, %c0_55] : memref<72x128xf32, #tpu.memory_space<vmem>>, vector<1x128xf32>
    %c61 = arith.constant 61 : index
    %c0_56 = arith.constant 0 : index
    %123 = vector.load %arg4[%c61, %c0_56] : memref<72x128xf32, #tpu.memory_space<vmem>>, vector<1x32xf32>
    %cst_57 = arith.constant dense<0.000000e+00> : vector<8xf32>
    %124 = vector.multi_reduction <add>, %111, %cst_57 [1] : vector<8x32xf32> to vector<8xf32>
    %125 = vector.shape_cast %124 : vector<8xf32> to vector<8x1xf32>
    %cst_58 = arith.constant 3.200000e+01 : f32
    %126 = vector.broadcast %cst_58 : f32 to vector<8x1xf32>
    %127 = arith.divf %125, %126 : vector<8x1xf32>
    %128 = vector.broadcast %127 : vector<8x1xf32> to vector<8x32xf32>
    %129 = arith.subf %111, %128 : vector<8x32xf32>
    %130 = arith.mulf %129, %129 : vector<8x32xf32>
    %cst_59 = arith.constant dense<0.000000e+00> : vector<8xf32>
    %131 = vector.multi_reduction <add>, %130, %cst_59 [1] : vector<8x32xf32> to vector<8xf32>
    %132 = vector.shape_cast %131 : vector<8xf32> to vector<8x1xf32>
    %cst_60 = arith.constant 3.200000e+01 : f32
    %133 = vector.broadcast %cst_60 : f32 to vector<8x1xf32>
    %134 = arith.divf %132, %133 : vector<8x1xf32>
    %135 = vector.broadcast %127 : vector<8x1xf32> to vector<8x32xf32>
    %136 = arith.subf %111, %135 : vector<8x32xf32>
    %cst_61 = arith.constant 9.99999974E-6 : f32
    %137 = vector.broadcast %cst_61 : f32 to vector<8x1xf32>
    %138 = arith.addf %134, %137 : vector<8x1xf32>
    %139 = math.rsqrt %138 : vector<8x1xf32>
    %140 = vector.broadcast %139 : vector<8x1xf32> to vector<8x32xf32>
    %141 = arith.mulf %136, %140 : vector<8x32xf32>
    %142 = arith.truncf %141 : vector<8x32xf32> to vector<8x32xbf16>
    %cst_62 = arith.constant dense<0.000000e+00> : vector<8x32xf32>
    %143 = tpu.matmul %142, %112, %cst_62 {dimension_numbers = #tpu.dot_dimension_numbers<[1], [0], [0], [1], [0, 0, 1, 1], [], []>} : vector<8x32xbf16>, vector<32x32xbf16>, vector<8x32xf32> -> vector<8x32xf32>
    %144 = vector.broadcast %118 : vector<1x32xf32> to vector<8x32xf32>
    %145 = arith.addf %143, %144 : vector<8x32xf32>
    %146 = arith.truncf %145 : vector<8x32xf32> to vector<8x32xbf16>
    %cst_63 = arith.constant dense<0.000000e+00> : vector<8x32xf32>
    %147 = tpu.matmul %142, %113, %cst_63 {dimension_numbers = #tpu.dot_dimension_numbers<[1], [0], [0], [1], [0, 0, 1, 1], [], []>} : vector<8x32xbf16>, vector<32x32xbf16>, vector<8x32xf32> -> vector<8x32xf32>
    %148 = vector.broadcast %119 : vector<1x32xf32> to vector<8x32xf32>
    %149 = arith.addf %147, %148 : vector<8x32xf32>
    %150 = arith.truncf %149 : vector<8x32xf32> to vector<8x32xbf16>
    %cst_64 = arith.constant dense<0.000000e+00> : vector<8x32xf32>
    %151 = tpu.matmul %142, %114, %cst_64 {dimension_numbers = #tpu.dot_dimension_numbers<[1], [0], [0], [1], [0, 0, 1, 1], [], []>} : vector<8x32xbf16>, vector<32x32xbf16>, vector<8x32xf32> -> vector<8x32xf32>
    %152 = vector.broadcast %120 : vector<1x32xf32> to vector<8x32xf32>
    %153 = arith.addf %151, %152 : vector<8x32xf32>
    %154 = arith.truncf %153 : vector<8x32xf32> to vector<8x32xbf16>
    %cst_65 = arith.constant dense<0.000000e+00> : vector<32x32xf32>
    %155 = tpu.matmul %3, %150, %cst_65 {dimension_numbers = #tpu.dot_dimension_numbers<[1], [0], [0], [1], [0, 0, 1, 1], [], []>} : vector<32x8xbf16>, vector<8x32xbf16>, vector<32x32xf32> -> vector<32x32xf32>
    %156 = arith.mulf %155, %2 : vector<32x32xf32>
    %157 = arith.truncf %156 : vector<32x32xf32> to vector<32x32xbf16>
    %cst_66 = arith.constant dense<0.000000e+00> : vector<32x32xf32>
    %158 = tpu.matmul %3, %154, %cst_66 {dimension_numbers = #tpu.dot_dimension_numbers<[1], [0], [0], [1], [0, 0, 1, 1], [], []>} : vector<32x8xbf16>, vector<8x32xbf16>, vector<32x32xf32> -> vector<32x32xf32>
    %159 = arith.mulf %158, %2 : vector<32x32xf32>
    %160 = arith.truncf %159 : vector<32x32xf32> to vector<32x32xbf16>
    %cst_67 = arith.constant dense<0.000000e+00> : vector<8x32xf32>
    %161 = tpu.matmul %146, %157, %cst_67 {dimension_numbers = #tpu.dot_dimension_numbers<[1], [1], [0], [0], [0, 0, 1, 0], [], []>} : vector<8x32xbf16>, vector<32x32xbf16>, vector<8x32xf32> -> vector<8x32xf32>
    %162 = arith.addf %161, %1 : vector<8x32xf32>
    %cst_68 = arith.constant dense<0xFF800000> : vector<8xf32>
    %163 = vector.multi_reduction <maximumf>, %162, %cst_68 [1] : vector<8x32xf32> to vector<8xf32>
    %164 = vector.shape_cast %163 : vector<8xf32> to vector<8x1xf32>
    %165 = vector.broadcast %164 : vector<8x1xf32> to vector<8x32xf32>
    %166 = arith.subf %162, %165 : vector<8x32xf32>
    %167 = math.exp %166 : vector<8x32xf32>
    %168 = arith.truncf %167 : vector<8x32xf32> to vector<8x32xbf16>
    %cst_69 = arith.constant dense<0.000000e+00> : vector<8x32xf32>
    %169 = tpu.matmul %168, %4, %cst_69 {dimension_numbers = #tpu.dot_dimension_numbers<[1], [0], [0], [1], [0, 0, 1, 1], [], []>} : vector<8x32xbf16>, vector<32x32xbf16>, vector<8x32xf32> -> vector<8x32xf32>
    %cst_70 = arith.constant 9.99999968E-21 : f32
    %170 = vector.broadcast %cst_70 : f32 to vector<8x32xf32>
    %171 = arith.maximumf %169, %170 : vector<8x32xf32>
    %172 = tpu.reciprocal %171 {approx = true} : vector<8x32xf32> -> vector<8x32xf32>
    %173 = arith.mulf %167, %172 : vector<8x32xf32>
    %174 = arith.truncf %173 : vector<8x32xf32> to vector<8x32xbf16>
    %cst_71 = arith.constant dense<0.000000e+00> : vector<8x32xf32>
    %175 = tpu.matmul %174, %160, %cst_71 {dimension_numbers = #tpu.dot_dimension_numbers<[1], [0], [0], [1], [0, 0, 1, 1], [], []>} : vector<8x32xbf16>, vector<32x32xbf16>, vector<8x32xf32> -> vector<8x32xf32>
    %176 = arith.truncf %175 : vector<8x32xf32> to vector<8x32xbf16>
    %cst_72 = arith.constant dense<0.000000e+00> : vector<8x32xf32>
    %177 = tpu.matmul %176, %115, %cst_72 {dimension_numbers = #tpu.dot_dimension_numbers<[1], [0], [0], [1], [0, 0, 1, 1], [], []>} : vector<8x32xbf16>, vector<32x32xbf16>, vector<8x32xf32> -> vector<8x32xf32>
    %178 = vector.broadcast %121 : vector<1x32xf32> to vector<8x32xf32>
    %179 = arith.addf %177, %178 : vector<8x32xf32>
    %180 = arith.addf %111, %179 : vector<8x32xf32>
    %cst_73 = arith.constant dense<0.000000e+00> : vector<8xf32>
    %181 = vector.multi_reduction <add>, %180, %cst_73 [1] : vector<8x32xf32> to vector<8xf32>
    %182 = vector.shape_cast %181 : vector<8xf32> to vector<8x1xf32>
    %cst_74 = arith.constant 3.200000e+01 : f32
    %183 = vector.broadcast %cst_74 : f32 to vector<8x1xf32>
    %184 = arith.divf %182, %183 : vector<8x1xf32>
    %185 = vector.broadcast %184 : vector<8x1xf32> to vector<8x32xf32>
    %186 = arith.subf %180, %185 : vector<8x32xf32>
    %187 = arith.mulf %186, %186 : vector<8x32xf32>
    %cst_75 = arith.constant dense<0.000000e+00> : vector<8xf32>
    %188 = vector.multi_reduction <add>, %187, %cst_75 [1] : vector<8x32xf32> to vector<8xf32>
    %189 = vector.shape_cast %188 : vector<8xf32> to vector<8x1xf32>
    %cst_76 = arith.constant 3.200000e+01 : f32
    %190 = vector.broadcast %cst_76 : f32 to vector<8x1xf32>
    %191 = arith.divf %189, %190 : vector<8x1xf32>
    %192 = vector.broadcast %184 : vector<8x1xf32> to vector<8x32xf32>
    %193 = arith.subf %180, %192 : vector<8x32xf32>
    %cst_77 = arith.constant 9.99999974E-6 : f32
    %194 = vector.broadcast %cst_77 : f32 to vector<8x1xf32>
    %195 = arith.addf %191, %194 : vector<8x1xf32>
    %196 = math.rsqrt %195 : vector<8x1xf32>
    %197 = vector.broadcast %196 : vector<8x1xf32> to vector<8x32xf32>
    %198 = arith.mulf %193, %197 : vector<8x32xf32>
    %199 = arith.truncf %198 : vector<8x32xf32> to vector<8x32xbf16>
    %cst_78 = arith.constant dense<0.000000e+00> : vector<8x128xf32>
    %200 = tpu.matmul %199, %116, %cst_78 {dimension_numbers = #tpu.dot_dimension_numbers<[1], [0], [0], [1], [0, 0, 1, 1], [], []>} : vector<8x32xbf16>, vector<32x128xbf16>, vector<8x128xf32> -> vector<8x128xf32>
    %201 = vector.broadcast %122 : vector<1x128xf32> to vector<8x128xf32>
    %202 = arith.addf %200, %201 : vector<8x128xf32>
    %cst_79 = arith.constant 1.702000e+00 : f32
    %203 = vector.broadcast %cst_79 : f32 to vector<8x128xf32>
    %204 = arith.mulf %203, %202 : vector<8x128xf32>
    %205 = arith.negf %204 : vector<8x128xf32>
    %206 = math.exp %205 : vector<8x128xf32>
    %cst_80 = arith.constant 1.000000e+00 : f32
    %207 = vector.broadcast %cst_80 : f32 to vector<8x128xf32>
    %208 = arith.addf %207, %206 : vector<8x128xf32>
    %209 = arith.divf %207, %208 : vector<8x128xf32>
    %210 = arith.mulf %202, %209 : vector<8x128xf32>
    %211 = arith.truncf %210 : vector<8x128xf32> to vector<8x128xbf16>
    %cst_81 = arith.constant dense<0.000000e+00> : vector<8x32xf32>
    %212 = tpu.matmul %211, %117, %cst_81 {dimension_numbers = #tpu.dot_dimension_numbers<[1], [0], [0], [1], [0, 0, 1, 1], [], []>} : vector<8x128xbf16>, vector<128x32xbf16>, vector<8x32xf32> -> vector<8x32xf32>
    %213 = arith.addf %180, %212 : vector<8x32xf32>
    %214 = vector.broadcast %123 : vector<1x32xf32> to vector<8x32xf32>
    %215 = arith.addf %213, %214 : vector<8x32xf32>
    %cst_82 = arith.constant dense<0.000000e+00> : vector<8xf32>
    %216 = vector.multi_reduction <add>, %215, %cst_82 [1] : vector<8x32xf32> to vector<8xf32>
    %217 = vector.shape_cast %216 : vector<8xf32> to vector<8x1xf32>
    %cst_83 = arith.constant 3.200000e+01 : f32
    %218 = vector.broadcast %cst_83 : f32 to vector<8x1xf32>
    %219 = arith.divf %217, %218 : vector<8x1xf32>
    %220 = vector.broadcast %219 : vector<8x1xf32> to vector<8x32xf32>
    %221 = arith.subf %215, %220 : vector<8x32xf32>
    %222 = arith.mulf %221, %221 : vector<8x32xf32>
    %cst_84 = arith.constant dense<0.000000e+00> : vector<8xf32>
    %223 = vector.multi_reduction <add>, %222, %cst_84 [1] : vector<8x32xf32> to vector<8xf32>
    %224 = vector.shape_cast %223 : vector<8xf32> to vector<8x1xf32>
    %cst_85 = arith.constant 3.200000e+01 : f32
    %225 = vector.broadcast %cst_85 : f32 to vector<8x1xf32>
    %226 = arith.divf %224, %225 : vector<8x1xf32>
    %227 = vector.broadcast %219 : vector<8x1xf32> to vector<8x32xf32>
    %228 = arith.subf %215, %227 : vector<8x32xf32>
    %cst_86 = arith.constant 9.99999974E-6 : f32
    %229 = vector.broadcast %cst_86 : f32 to vector<8x1xf32>
    %230 = arith.addf %226, %229 : vector<8x1xf32>
    %231 = math.rsqrt %230 : vector<8x1xf32>
    %232 = vector.broadcast %231 : vector<8x1xf32> to vector<8x32xf32>
    %233 = arith.mulf %228, %232 : vector<8x32xf32>
    %234 = arith.truncf %233 : vector<8x32xf32> to vector<8x32xbf16>
    %235 = arith.index_cast %arg0 : i32 to index
    %236 = memref.load %arg1[%235] : memref<2xi32, #tpu.memory_space<smem>>
    %237 = tpu.iota {dimensions = array<i32: 1>} : vector<1x8xi32>
    %238 = vector.broadcast %236 : i32 to vector<1x8xi32>
    %239 = arith.cmpi eq, %237, %238 : vector<1x8xi32>
    %240 = arith.extui %239 : vector<1x8xi1> to vector<1x8xi32>
    %241 = arith.sitofp %240 : vector<1x8xi32> to vector<1x8xf32>
    %242 = arith.truncf %241 : vector<1x8xf32> to vector<1x8xbf16>
    %cst_87 = arith.constant dense<0.000000e+00> : vector<1x32xf32>
    %243 = tpu.matmul %242, %234, %cst_87 {dimension_numbers = #tpu.dot_dimension_numbers<[1], [0], [0], [1], [0, 0, 1, 1], [], []>} : vector<1x8xbf16>, vector<8x32xbf16>, vector<1x32xf32> -> vector<1x32xf32>
    %c576 = arith.constant 576 : index
    %c0_88 = arith.constant 0 : index
    %244 = vector.load %arg3[%c576, %c0_88] : memref<672x128xbf16, #tpu.memory_space<vmem>>, vector<32x128xbf16>
    %c64_89 = arith.constant 64 : index
    %c0_90 = arith.constant 0 : index
    %245 = vector.load %arg4[%c64_89, %c0_90] : memref<72x128xf32, #tpu.memory_space<vmem>>, vector<1x128xf32>
    %246 = arith.truncf %243 : vector<1x32xf32> to vector<1x32xbf16>
    %cst_91 = arith.constant dense<0.000000e+00> : vector<1x128xf32>
    %247 = tpu.matmul %246, %244, %cst_91 {dimension_numbers = #tpu.dot_dimension_numbers<[1], [0], [0], [1], [0, 0, 1, 1], [], []>} : vector<1x32xbf16>, vector<32x128xbf16>, vector<1x128xf32> -> vector<1x128xf32>
    %248 = arith.addf %247, %245 : vector<1x128xf32>
    %c0_92 = arith.constant 0 : index
    %c0_93 = arith.constant 0 : index
    %c0_94 = arith.constant 0 : index
    %249 = vector.load %arg5[%c0_92, %c0_93, %c0_94] : memref<1x1x128xf32, #tpu.memory_space<vmem>>, vector<1x1x128xf32>
    %250 = vector.shape_cast %249 : vector<1x1x128xf32> to vector<1x128xf32>
    %251 = vector.shape_cast %248 : vector<1x128xf32> to vector<1x1x128xf32>
    tpu.vector_store %arg5[%c0_92, %c0_93, %c0_94], %251 {strides = array<i32>} : memref<1x1x128xf32, #tpu.memory_space<vmem>>, vector<1x1x128xf32>,
    return
  }
  func.func @transform_0(%arg0: i32, %arg1: memref<2xi32, #tpu.memory_space<smem>>) -> (i32, i32, i32) {
    %c0_i32 = arith.constant 0 : i32
    %c0_i32_0 = arith.constant 0 : i32
    %c0_i32_1 = arith.constant 0 : i32
    return %arg0, %c0_i32, %c0_i32_0 : i32, i32, i32
  }
  func.func @transform_1(%arg0: i32, %arg1: memref<2xi32, #tpu.memory_space<smem>>) -> (i32, i32) {
    %c0_i32 = arith.constant 0 : i32
    %c0_i32_0 = arith.constant 0 : i32
    %c0_i32_1 = arith.constant 0 : i32
    return %c0_i32, %c0_i32_0 : i32, i32
  }
  func.func @transform_2(%arg0: i32, %arg1: memref<2xi32, #tpu.memory_space<smem>>) -> (i32, i32) {
    %c0_i32 = arith.constant 0 : i32
    %c0_i32_0 = arith.constant 0 : i32
    %c0_i32_1 = arith.constant 0 : i32
    return %c0_i32, %c0_i32_0 : i32, i32
  }
  func.func @transform_3(%arg0: i32, %arg1: memref<2xi32, #tpu.memory_space<smem>>) -> (i32, i32, i32) {
    %c0_i32 = arith.constant 0 : i32
    %c0_i32_0 = arith.constant 0 : i32
    %c0_i32_1 = arith.constant 0 : i32
    return %arg0, %c0_i32, %c0_i32_0 : i32, i32, i32
  }
}

</mosaic_0001>

<llo_original>
// kernel: text_encoder.1
$region0: #{text_encoder.1}
  #allocation0 [shape = 'u32[]', space=smem, size = 0x4, offset = 0x4, fixed_abs, tag = 'smem constant byte address 0x4 - core index']
  #allocation1 [shape = 'u32[144,128]{1,0:T(1,128)}', space=vmem, size = 0x12000, scoped, tag = 'internal scratch']
  #allocation2 [shape = 's32[1]{0}', space=sflag, size = 0x4, scoped, tag = 'scoped memory for text_encoder.1']
  #allocation3 [shape = 'u8[512]{0}', space=smem, size = 0x200, scoped, tag = 'prefetched SMEM operand 0']
  %s0 = inlined_call_operand.vmem [shape: s32[2], index: 0, kind: input, shape index: {}]
  %s1 = inlined_call_operand.hbm [shape: f32[2,8,32], index: 1, kind: input, shape index: {}]
  %s2 = inlined_call_operand.hbm [shape: bf16[672,128], index: 2, kind: input, shape index: {}]
  %s3 = inlined_call_operand.hbm [shape: f32[72,128], index: 3, kind: input, shape index: {}]
  %s4 = inlined_call_operand.hbm [shape: f32[2,1,128], index: 4, kind: output, shape index: {}]
  %s5 = sld [smem:[#allocation0]]
  $region57: #{text_encoder.1} parent=0
    _
  %s7 = ssub.s32 1, %s5
  %s8 = scalar_select 0, %s7, %s5
  %s9 = sshll.u32 %s0, 4
  %s10 = int_to_ptr.vmem [resolvable:$true] %s9
  %12 = dma.vmem_to_smem %s10, 16, [#allocation3], [#allocation2]
  %13 = dma.done [#allocation2], 16
  %14 = sfence
  $region1: #{text_encoder.1} parent=0
    #allocation4 [shape = 'u8[8192]{0}', space=vmem, size = 0x2000, scoped, tag = 'input window, operand 1']
    #allocation5 [shape = 's32[2]{0}', space=sflag, size = 0x8, scoped, tag = 'scoped memory for text_encoder.1']
    #allocation6 [shape = 's32[2]{0}', space=sflag, size = 0x8, scoped, tag = 'scoped memory for text_encoder.1']
    #allocation7 [shape = 'u8[172032]{0}', space=vmem, size = 0x2a000, scoped, tag = 'input window, operand 2, single buffered']
    #allocation8 [shape = 's32[1]{0}', space=sflag, size = 0x4, scoped, tag = 'scoped memory for text_encoder.1']
    #allocation9 [shape = 'u8[36864]{0}', space=vmem, size = 0x9000, scoped, tag = 'input window, operand 3, single buffered']
    #allocation10 [shape = 'u8[1024]{0}', space=vmem, size = 0x400, scoped, tag = 'output window, operand 0']
    %15 = vsyncpa [#allocation5], 0
    %s16 = scalar_lea.sflag [#allocation5], 1
    %17 = vsyncpa %s16, 0
    %18 = vsyncpa [#allocation8], 0
    %19 = vsyncpa [#allocation6], 0
    %s20 = scalar_lea.sflag [#allocation6], 1
    %21 = vsyncpa %s20, 0
    loop: start=0, step=1, limit=4
    $region2: #{text_encoder.1} parent=1 // loop_pre_header
      _
    $region3: #{text_encoder.1} parent=1 // loop_header
      %s23 = sphi 0, %s27
      %p24 = scmp.ge.s32.totalorder %s23, 4
      %s33 = sphi 0, %s35
      %s36 = sphi 0, %s33
      %s37 = sphi 0, %s36
      %s53 = sphi 0, %s37
      %s57 = sphi 0, %s57
      %s59 = sphi 0, %s57
      %s60 = sphi 0, %s59
      %s74 = sphi 0, %s60
      %s78 = sphi 0, %s78
      %s80 = sphi 0, %s78
      %s81 = sphi 0, %s80
      %s95 = sphi 0, %s81
      %s101 = sphi 0, %s103
      %s104 = sphi 0, %s101
      %s105 = sphi 0, %s104
      %s121 = sphi 0, %s105
    $region4: #{text_encoder.1} parent=1 // loop_header_branch
      %26 = sbr.rel (%p24) target = $region8
    $region5: #{text_encoder.1} parent=1 // loop_body
      %s28 = ssub.s32 %s23, 1
      %s29 = ssub.s32 %s23, 2
      %s30 = sadd.s32 %s23, 1
      %s31 = ssub.s32 %s23, %s30
      %p32 = scmp.eq.s32.totalorder %s31, 0
      %s34 = sadd.s32 %s33, 1
      %s35 = scalar_select %p32, %s33, %s34
      %p38 = pneg %p32
      %p39 = scmp.eq.s32.totalorder %s23, 1
      %p40 = por %p38, %p39
      %p41 = scmp.ne.s32.totalorder %s33, %s36
      %p42 = scmp.eq.s32.totalorder %s23, 0
      %p43 = por %p41, %p42
      %p44 = scmp.ne.s32.totalorder %s33, %s36
      %p45 = scmp.eq.s32.totalorder %s28, 1
      %p46 = por %p44, %p45
      %p47 = scmp.ne.s32.totalorder %s36, %s37
      %p48 = scmp.eq.s32.totalorder %s28, 0
      %p49 = por %p47, %p48
      %p50 = scmp.ne.s32.totalorder %s36, %s37
      %p51 = scmp.eq.s32.totalorder %s29, 1
      %p52 = por %p50, %p51
      %p54 = scmp.ne.s32.totalorder %s37, %s53
      %p55 = scmp.eq.s32.totalorder %s29, 0
      %p56 = por %p54, %p55
      %s58 = sadd.s32 %s57, 1
      %p61 = scmp.eq.s32.totalorder %s23, 1
      %p62 = scmp.ne.s32.totalorder %s57, %s59
      %p63 = scmp.eq.s32.totalorder %s23, 0
      %p64 = por %p62, %p63
      %p65 = scmp.ne.s32.totalorder %s57, %s59
      %p66 = scmp.eq.s32.totalorder %s28, 1
      %p67 = por %p65, %p66
      %p68 = scmp.ne.s32.totalorder %s59, %s60
      %p69 = scmp.eq.s32.totalorder %s28, 0
      %p70 = por %p68, %p69
      %p71 = scmp.ne.s32.totalorder %s59, %s60
      %p72 = scmp.eq.s32.totalorder %s29, 1
      %p73 = por %p71, %p72
      %p75 = scmp.ne.s32.totalorder %s60, %s74
      %p76 = scmp.eq.s32.totalorder %s29, 0
      %p77 = por %p75, %p76
      %s79 = sadd.s32 %s78, 1
      %p82 = scmp.eq.s32.totalorder %s23, 1
      %p83 = scmp.ne.s32.totalorder %s78, %s80
      %p84 = scmp.eq.s32.totalorder %s23, 0
      %p85 = por %p83, %p84
      %p86 = scmp.ne.s32.totalorder %s78, %s80
      %p87 = scmp.eq.s32.totalorder %s28, 1
      %p88 = por %p86, %p87
      %p89 = scmp.ne.s32.totalorder %s80, %s81
      %p90 = scmp.eq.s32.totalorder %s28, 0
      %p91 = por %p89, %p90
      %p92 = scmp.ne.s32.totalorder %s80, %s81
      %p93 = scmp.eq.s32.totalorder %s29, 1
      %p94 = por %p92, %p93
      %p96 = scmp.ne.s32.totalorder %s81, %s95
      %p97 = scmp.eq.s32.totalorder %s29, 0
      %p98 = por %p96, %p97
      %s99 = ssub.s32 %s23, %s30
      %p100 = scmp.eq.s32.totalorder %s99, 0
      %s102 = sadd.s32 %s101, 1
      %s103 = scalar_select %p100, %s101, %s102
      %p106 = pneg %p100
      %p107 = scmp.eq.s32.totalorder %s23, 1
      %p108 = por %p106, %p107
      %p109 = scmp.ne.s32.totalorder %s101, %s104
      %p110 = scmp.eq.s32.totalorder %s23, 0
      %p111 = por %p109, %p110
      %p112 = scmp.ne.s32.totalorder %s101, %s104
      %p113 = scmp.eq.s32.totalorder %s28, 1
      %p114 = por %p112, %p113
      %p115 = scmp.ne.s32.totalorder %s104, %s105
      %p116 = scmp.eq.s32.totalorder %s28, 0
      %p117 = por %p115, %p116
      %p118 = scmp.ne.s32.totalorder %s104, %s105
      %p119 = scmp.eq.s32.totalorder %s29, 1
      %p120 = por %p118, %p119
      %p122 = scmp.ne.s32.totalorder %s105, %s121
      %p123 = scmp.eq.s32.totalorder %s29, 0
      %p124 = por %p122, %p123
      %p125 = scmp.le.s32.totalorder 1, %s23
      %p126 = scmp.lt.s32.totalorder %s23, 3
      %p127 = pnand %p125, %p126
      %p128 = pneg %p127
      // Predicated region
      $region9: #{text_encoder.1} parent=5 // pred_check
        _
      $region10: #{text_encoder.1} parent=5 // pred_check_branch
        %130 = sbr.rel (%p127) target = $region12
      $region11: #{text_encoder.1} parent=5 // pred_region
        %s131 = ssub.s32 %s23, 1
        // Predicated region
        $region13: #{text_encoder.1} parent=11 // pred_check
          %p132 = pneg %p70
        $region14: #{text_encoder.1} parent=11 // pred_check_branch
          %134 = sbr.rel (%p132) target = $region16
        $region15: #{text_encoder.1} parent=11 // pred_region
          %s136 = ssub.s32 5376, 5376
          %137 = vsyncadd [#allocation8], %s136
          %s138 = sshll.u32 [#allocation7], 4
          %s139 = int_to_ptr.vmem [resolvable:$true] %s138
          %144 = dma.hbm_to_vmem [thread:$0]  %s2, 5376, %s139, [#allocation8], 64, 64, 4
        $region16: #{text_encoder.1} parent=11 // pred_fallthru
          _
        // Predicated region
        $region17: #{text_encoder.1} parent=11 // pred_check
          %p145 = pneg %p91
        $region18: #{text_encoder.1} parent=11 // pred_check_branch
          %147 = sbr.rel (%p145) target = $region20
        $region19: #{text_encoder.1} parent=11 // pred_region
          %s149 = ssub.s32 1152, 1152
          %150 = vsyncadd [#allocation8], %s149
          %s151 = sshll.u32 [#allocation9], 4
          %s152 = int_to_ptr.vmem [resolvable:$true] %s151
          %157 = dma.hbm_to_vmem [thread:$0]  %s3, 1152, %s152, [#allocation8], 128, 128, 8
        $region20: #{text_encoder.1} parent=11 // pred_fallthru
          _
      $region12: #{text_encoder.1} parent=5 // pred_fallthru
        _
      %p158 = scmp.lt.s32.totalorder %s23, 2
      // Predicated region
      $region21: #{text_encoder.1} parent=5 // pred_check
        %p159 = pneg %p158
      $region22: #{text_encoder.1} parent=5 // pred_check_branch
        %161 = sbr.rel (%p159) target = $region24
      $region23: #{text_encoder.1} parent=5 // pred_region
        // Predicated region
        $region25: #{text_encoder.1} parent=23 // pred_check
          %p162 = pneg %p43
        $region26: #{text_encoder.1} parent=23 // pred_check_branch
          %164 = sbr.rel (%p162) target = $region28
        $region27: #{text_encoder.1} parent=23 // pred_region
          %s165 = sand.u32 %s33, 1
          %s166 = scalar_lea.sflag [#allocation5], %s165
          %s167 = sand.u32 %s33, 1
          %s168 = smul.addr %s167, 8
          %s169 = scalar_lea.vmem [#allocation4], %s168
          %s171 = ssub.s32 128, 128
          %172 = vsyncadd %s166, %s171
          %s173 = smul.addr %s23, 128
          %s174 = scalar_lea.hbm %s1, %s173
          %s176 = sshll.u32 %s169, 4
          %s177 = int_to_ptr.vmem [resolvable:$true] %s176
          %179 = dma.hbm_to_vmem [thread:$0]  %s174, 128, %s177, %s166
        $region28: #{text_encoder.1} parent=23 // pred_fallthru
          _
      $region24: #{text_encoder.1} parent=5 // pred_fallthru
        _
      %p180 = scmp.le.s32.totalorder 1, %s23
      %p181 = scmp.lt.s32.totalorder %s23, 3
      %p182 = pnand %p180, %p181
      %p183 = pneg %p182
      // Predicated region
      $region29: #{text_encoder.1} parent=5 // pred_check
        _
      $region30: #{text_encoder.1} parent=5 // pred_check_branch
        %185 = sbr.rel (%p182) target = $region32
      $region31: #{text_encoder.1} parent=5 // pred_region
        %s186 = ssub.s32 %s23, 1
        %s187 = sand.u32 %s36, 1
        %s188 = scalar_lea.sflag [#allocation5], %s187
        %s189 = sand.u32 %s36, 1
        %s190 = smul.addr %s189, 8
        %s191 = scalar_lea.vmem [#allocation4], %s190
        // Predicated region
        $region33: #{text_encoder.1} parent=31 // pred_check
          %p192 = pneg %p49
        $region34: #{text_encoder.1} parent=31 // pred_check_branch
          %194 = sbr.rel (%p192) target = $region36
        $region35: #{text_encoder.1} parent=31 // pred_region
          %195 = dma.done %s188, 128
        $region36: #{text_encoder.1} parent=31 // pred_fallthru
          _
        // Predicated region
        $region37: #{text_encoder.1} parent=31 // pred_check
          %p196 = pneg %p70
        $region38: #{text_encoder.1} parent=31 // pred_check_branch
          %198 = sbr.rel (%p196) target = $region40
        $region39: #{text_encoder.1} parent=31 // pred_region
          %199 = dma.done [#allocation8], 5376
        $region40: #{text_encoder.1} parent=31 // pred_fallthru
          _
        // Predicated region
        $region41: #{text_encoder.1} parent=31 // pred_check
          %p200 = pneg %p91
        $region42: #{text_encoder.1} parent=31 // pred_check_branch
          %202 = sbr.rel (%p200) target = $region44
        $region43: #{text_encoder.1} parent=31 // pred_region
          %203 = dma.done [#allocation8], 1152
        $region44: #{text_encoder.1} parent=31 // pred_fallthru
          _
        %s204 = sand.u32 %s36, 1
        %s205 = scalar_lea.sflag [#allocation5], %s204
        %s206 = sand.u32 %s36, 1
        %s207 = smul.addr %s206, 8
        %s208 = scalar_lea.vmem [#allocation4], %s207
        %p209 = pneg %p49
        %p210 = pneg %p46
        %p211 = pneg %p70
        %p212 = pneg %p67
        %p213 = pneg %p91
        %p214 = pneg %p88
        %p215 = pneg %p117
        %p216 = pneg %p114
        %s217 = sand.u32 %s104, 1
        %s218 = scalar_lea.sflag [#allocation6], %s217
        %s219 = sand.u32 %s104, 1
        %s220 = scalar_lea.vmem [#allocation10], %s219
        %v222 = vld [vmem:[#allocation9] sm:$0xff]
        %v223 = vld [vmem:[#allocation9 + $0x8] sm:$0xff]
        %v224 = vld [vmem:[#allocation9 + $0x10] sm:$0xff]
        %v225 = vld [vmem:[#allocation9 + $0x18] sm:$0xff]
        %v226 = vld [vmem:[#allocation9 + $0x20] sm:$0xff]
        %v227 = vld [vmem:[#allocation9 + $0x28] sm:$0xff]
        %v228 = vld [vmem:[#allocation7 + $0x130] sm:$0xf]
        %v229 = vld [vmem:[#allocation7 + $0x134] sm:$0xf]
        %v230 = vld [vmem:[#allocation7 + $0x138] sm:$0xf]
        %v231 = vld [vmem:[#allocation7 + $0x13c] sm:$0xf]
        %v232 = vld [vmem:[#allocation7 + $0x140] sm:$0xf]
        %v233 = vld [vmem:[#allocation7 + $0x144] sm:$0xf]
        %v234 = vld [vmem:[#allocation7 + $0x148] sm:$0xf]
        %v235 = vld [vmem:[#allocation7 + $0x14c] sm:$0xf]
        %v236 = vld [vmem:[%s191] sm:$0xff]
        %v237 = vadd.f32 %v236, %v222
        %v238 = vld [vmem:[#allocation7] sm:$0xf]
        %v239 = vld [vmem:[#allocation7 + $0x4] sm:$0xf]
        %v240 = vld [vmem:[#allocation7 + $0x8] sm:$0xf]
        %v241 = vld [vmem:[#allocation7 + $0xc] sm:$0xf]
        %v242 = vld [vmem:[#allocation7 + $0x10] sm:$0xf]
        %v243 = vld [vmem:[#allocation7 + $0x14] sm:$0xf]
        %v244 = vld [vmem:[#allocation7 + $0x18] sm:$0xf]
        %v245 = vld [vmem:[#allocation7 + $0x1c] sm:$0xf]
        %v246 = vld [vmem:[#allocation7 + $0x20] sm:$0xf]
        %v247 = vld [vmem:[#allocation7 + $0x24] sm:$0xf]
        %v248 = vld [vmem:[#allocation7 + $0x28] sm:$0xf]
        %v249 = vld [vmem:[#allocation7 + $0x2c] sm:$0xf]
        %v250 = vld [vmem:[#allocation7 + $0x30] sm:$0xf]
        %v251 = vld [vmem:[#allocation7 + $0x34] sm:$0xf]
        %v252 = vld [vmem:[#allocation7 + $0x38] sm:$0xf]
        %v253 = vld [vmem:[#allocation7 + $0x3c] sm:$0xf]
        %v254 = vld [vmem:[#allocation7 + $0x40] sm:$0xf]
        %v255 = vld [vmem:[#allocation7 + $0x44] sm:$0xf]
        %v256 = vld [vmem:[#allocation7 + $0x48] sm:$0xf]
        %v257 = vld [vmem:[#allocation7 + $0x4c] sm:$0xf]
        %v258 = vld [vmem:[#allocation7 + $0x50] sm:$0xf]
        %v259 = vld [vmem:[#allocation7 + $0x54] sm:$0xf]
        %v260 = vld [vmem:[#allocation7 + $0x58] sm:$0xf]
        %v261 = vld [vmem:[#allocation7 + $0x5c] sm:$0xf]
        %v262 = vld [vmem:[#allocation7 + $0x60] sm:$0xf]
        %v263 = vld [vmem:[#allocation7 + $0x64] sm:$0xf]
        %v264 = vld [vmem:[#allocation7 + $0x68] sm:$0xf]
        %v265 = vld [vmem:[#allocation7 + $0x6c] sm:$0xf]
        %v266 = vld [vmem:[#allocation7 + $0x70] sm:$0xf]
        %v267 = vld [vmem:[#allocation7 + $0x74] sm:$0xf]
        %v268 = vld [vmem:[#allocation7 + $0x78] sm:$0xf]
        %v269 = vld [vmem:[#allocation7 + $0x7c] sm:$0xf]
        %v270 = vld [vmem:[#allocation7 + $0x80] sm:$0xf]
        %v271 = vld [vmem:[#allocation7 + $0x84] sm:$0xf]
        %v272 = vld [vmem:[#allocation7 + $0x88] sm:$0xf]
        %v273 = vld [vmem:[#allocation7 + $0x8c] sm:$0xf]
        %v274 = vld [vmem:[#allocation9 + $0x30] sm:$0x1]
        %v275 = vld [vmem:[#allocation9 + $0x31] sm:$0x1]
        %v276 = vld [vmem:[#allocation9 + $0x32] sm:$0x1]
        %v277 = vld [vmem:[#allocation9 + $0x33] sm:$0x1]
        %v278 = vld [vmem:[#allocation9 + $0x34] sm:$0x1]
        %v279 = vld [vmem:[#allocation9 + $0x35] sm:$0x1]
        %vm280 = vcmask 261120
        %v281 = vsel %vm280, %v237, 0.0
        %282 = vadd.xlane.f32.xlu0 %v281
        %v283 = vpop.xlane.xlu0 %282
        %v284 = vrcp.pop 32.0
        %v285 = vmul.f32 %v283, %v284
        %v286 = vsub.f32 %v237, %v285
        %v287 = vmul.f32 %v286, %v286
        %v288 = vsel %vm280, %v287, 0.0
        %289 = vadd.xlane.f32.xlu0 %v288
        %v290 = vpop.xlane.xlu0 %289
        %v291 = vmul.f32 %v290, %v284
        %v292 = vadd.f32 %v291, 1e-05
        %v293 = vrsqrt.pop %v292
        %v294 = vmul.f32 %v286, %v293
        %v295 = vpack.c.bf16 %v294, %v294
        %v296 = vlaneseq
        %v297 = vshrl.u32 %v296, 7
        %v298 = vsub.s32 0, %v297
        %v299 = vrot.slane %v274, %v298
        %v304 = vunpack.c.l.b16 %v238
        %v305 = vunpack.c.l.b16 %v239
        %v306 = vunpack.c.l.b16 %v240
        %v307 = vunpack.c.l.b16 %v241
        %v308 = vpack.c.b16 %v305, %v304
        %v309 = vpack.c.b16 %v307, %v306
        %v313 = vsel %vm280, %v295, 0
        %315 = vmatprep.subr.bf16.mxu0 0
        %316 = vmatpush1.bf16.msra.mxu0 0
        %317 = vmatprep.subr.bf16.mxu0 0
        %318 = vmatpush1.bf16.msra.mxu0 0
        %319 = vmatprep.subr.bf16.mxu0 0
        %320 = vmatpush1.bf16.msra.mxu0 0
        %321 = vmatprep.subr.bf16.mxu0 0
        %322 = vmatpush1.bf16.msra.mxu0 0
        %323 = vmatprep.subr.bf16.mxu0 0
        %324 = vmatpush1.bf16.msra.mxu0 0
        %325 = vmatprep.subr.bf16.mxu0 0
        %326 = vmatpush1.bf16.msra.mxu0 0
        %327 = vmatprep.subr.bf16.mxu0 0
        %328 = vmatpush1.bf16.msra.mxu0 %v309
        %329 = vmatprep.subr.bf16.mxu0 0
        %330 = vmatpush1.bf16.msra.mxu0 %v308
        %331 = vmatprep.subr.bf16.mxu0 0
        %332 = vmatpush2.bf16.msra.mxu0 0
        %333 = vmatprep.subr.bf16.mxu0 0
        %334 = vmatpush2.bf16.msra.mxu0 0
        %335 = vmatprep.subr.bf16.mxu0 0
        %336 = vmatpush2.bf16.msra.mxu0 0
        %337 = vmatprep.subr.bf16.mxu0 0
        %338 = vmatpush2.bf16.msra.mxu0 0
        %339 = vmatprep.subr.bf16.mxu0 0
        %340 = vmatpush2.bf16.msra.mxu0 0
        %341 = vmatprep.subr.bf16.mxu0 0
        %342 = vmatpush2.bf16.msra.mxu0 0
        %343 = vmatprep.subr.bf16.mxu0 0
        %344 = vmatpush2.bf16.msra.mxu0 0
        %345 = vmatprep.subr.bf16.mxu0 0
        %346 = vmatpush2.bf16.msra.mxu0 0
        %347 = vmatprep.mubr.bf16.mxu0 0
        %348 = vmatmul.mubr.bf16.gmra.mxu0 %v313
        %v349 = vpop.f32.mrf.mxu0
        %v350 = vadd.f32 %v299, %v349
        %v351 = vpop.f32.mrf.mxu0
        %v352 = vpop.f32.mrf.mxu0
        %v353 = vpop.f32.mrf.mxu0
        %354 = vdwg.mxu0
        %v355 = vpack.c.bf16 %v350, %v350
        %v356 = vlaneseq
        %v357 = vshrl.u32 %v356, 7
        %v358 = vsub.s32 0, %v357
        %v359 = vrot.slane %v275, %v358
        %v364 = vunpack.c.l.b16 %v242
        %v365 = vunpack.c.l.b16 %v243
        %v366 = vunpack.c.l.b16 %v244
        %v367 = vunpack.c.l.b16 %v245
        %v368 = vpack.c.b16 %v365, %v364
        %v369 = vpack.c.b16 %v367, %v366
        %372 = vmatprep.subr.bf16.mxu0 0
        %373 = vmatpush1.bf16.msra.mxu0 0
        %374 = vmatprep.subr.bf16.mxu0 0
        %375 = vmatpush1.bf16.msra.mxu0 0
        %376 = vmatprep.subr.bf16.mxu0 0
        %377 = vmatpush1.bf16.msra.mxu0 0
        %378 = vmatprep.subr.bf16.mxu0 0
        %379 = vmatpush1.bf16.msra.mxu0 0
        %380 = vmatprep.subr.bf16.mxu0 0
        %381 = vmatpush1.bf16.msra.mxu0 0
        %382 = vmatprep.subr.bf16.mxu0 0
        %383 = vmatpush1.bf16.msra.mxu0 0
        %384 = vmatprep.subr.bf16.mxu0 0
        %385 = vmatpush1.bf16.msra.mxu0 %v369
        %386 = vmatprep.subr.bf16.mxu0 0
        %387 = vmatpush1.bf16.msra.mxu0 %v368
        %388 = vmatprep.subr.bf16.mxu0 0
        %389 = vmatpush2.bf16.msra.mxu0 0
        %390 = vmatprep.subr.bf16.mxu0 0
        %391 = vmatpush2.bf16.msra.mxu0 0
        %392 = vmatprep.subr.bf16.mxu0 0
        %393 = vmatpush2.bf16.msra.mxu0 0
        %394 = vmatprep.subr.bf16.mxu0 0
        %395 = vmatpush2.bf16.msra.mxu0 0
        %396 = vmatprep.subr.bf16.mxu0 0
        %397 = vmatpush2.bf16.msra.mxu0 0
        %398 = vmatprep.subr.bf16.mxu0 0
        %399 = vmatpush2.bf16.msra.mxu0 0
        %400 = vmatprep.subr.bf16.mxu0 0
        %401 = vmatpush2.bf16.msra.mxu0 0
        %402 = vmatprep.subr.bf16.mxu0 0
        %403 = vmatpush2.bf16.msra.mxu0 0
        %404 = vmatprep.mubr.bf16.mxu0 0
        %405 = vmatmul.mubr.bf16.gmra.mxu0 %v313
        %v406 = vpop.f32.mrf.mxu0
        %v407 = vadd.f32 %v359, %v406
        %v408 = vpop.f32.mrf.mxu0
        %v409 = vpop.f32.mrf.mxu0
        %v410 = vpop.f32.mrf.mxu0
        %411 = vdwg.mxu0
        %v412 = vpack.c.bf16 %v407, %v407
        %v413 = vlaneseq
        %v414 = vshrl.u32 %v413, 7
        %v415 = vsub.s32 0, %v414
        %v416 = vrot.slane %v276, %v415
        %v421 = vunpack.c.l.b16 %v246
        %v422 = vunpack.c.l.b16 %v247
        %v423 = vunpack.c.l.b16 %v248
        %v424 = vunpack.c.l.b16 %v249
        %v425 = vpack.c.b16 %v422, %v421
        %v426 = vpack.c.b16 %v424, %v423
        %429 = vmatprep.subr.bf16.mxu0 0
        %430 = vmatpush1.bf16.msra.mxu0 0
        %431 = vmatprep.subr.bf16.mxu0 0
        %432 = vmatpush1.bf16.msra.mxu0 0
        %433 = vmatprep.subr.bf16.mxu0 0
        %434 = vmatpush1.bf16.msra.mxu0 0
        %435 = vmatprep.subr.bf16.mxu0 0
        %436 = vmatpush1.bf16.msra.mxu0 0
        %437 = vmatprep.subr.bf16.mxu0 0
        %438 = vmatpush1.bf16.msra.mxu0 0
        %439 = vmatprep.subr.bf16.mxu0 0
        %440 = vmatpush1.bf16.msra.mxu0 0
        %441 = vmatprep.subr.bf16.mxu0 0
        %442 = vmatpush1.bf16.msra.mxu0 %v426
        %443 = vmatprep.subr.bf16.mxu0 0
        %444 = vmatpush1.bf16.msra.mxu0 %v425
        %445 = vmatprep.subr.bf16.mxu0 0
        %446 = vmatpush2.bf16.msra.mxu0 0
        %447 = vmatprep.subr.bf16.mxu0 0
        %448 = vmatpush2.bf16.msra.mxu0 0
        %449 = vmatprep.subr.bf16.mxu0 0
        %450 = vmatpush2.bf16.msra.mxu0 0
        %451 = vmatprep.subr.bf16.mxu0 0
        %452 = vmatpush2.bf16.msra.mxu0 0
        %453 = vmatprep.subr.bf16.mxu0 0
        %454 = vmatpush2.bf16.msra.mxu0 0
        %455 = vmatprep.subr.bf16.mxu0 0
        %456 = vmatpush2.bf16.msra.mxu0 0
        %457 = vmatprep.subr.bf16.mxu0 0
        %458 = vmatpush2.bf16.msra.mxu0 0
        %459 = vmatprep.subr.bf16.mxu0 0
        %460 = vmatpush2.bf16.msra.mxu0 0
        %461 = vmatprep.mubr.bf16.mxu0 0
        %462 = vmatmul.mubr.bf16.gmra.mxu0 %v313
        %v463 = vpop.f32.mrf.mxu0
        %v464 = vadd.f32 %v416, %v463
        %v465 = vpop.f32.mrf.mxu0
        %v466 = vpop.f32.mrf.mxu0
        %v467 = vpop.f32.mrf.mxu0
        %468 = vdwg.mxu0
        %v469 = vpack.c.bf16 %v464, %v464
        %v474 = vunpack.c.l.b16 %v228
        %v475 = vunpack.c.l.b16 %v229
        %v476 = vunpack.c.l.b16 %v230
        %v477 = vunpack.c.l.b16 %v231
        %v478 = vpack.c.b16 %v475, %v474
        %v479 = vpack.c.b16 %v477, %v476
        %vm480 = vcmask 64512
        %v482 = vsel %vm480, %v478, 0
        %v485 = vsel %vm480, %v479, 0
        %vm487 = vcmask 1043456
        %v489 = vsel %vm487, %v412, 0
        %491 = vmatprep.subr.bf16.mxu0 0
        %492 = vmatpush1.bf16.msra.mxu0 0
        %493 = vmatprep.subr.bf16.mxu0 0
        %494 = vmatpush1.bf16.msra.mxu0 0
        %495 = vmatprep.subr.bf16.mxu0 0
        %496 = vmatpush1.bf16.msra.mxu0 0
        %497 = vmatprep.subr.bf16.mxu0 0
        %498 = vmatpush1.bf16.msra.mxu0 0
        %499 = vmatprep.subr.bf16.mxu0 0
        %500 = vmatpush1.bf16.msra.mxu0 0
        %501 = vmatprep.subr.bf16.mxu0 0
        %502 = vmatpush1.bf16.msra.mxu0 0
        %503 = vmatprep.subr.bf16.mxu0 0
        %504 = vmatpush1.bf16.msra.mxu0 0
        %505 = vmatprep.subr.bf16.mxu0 0
        %506 = vmatpush1.bf16.msra.mxu0 %v489
        %507 = vmatprep.subr.bf16.mxu0 0
        %508 = vmatpush2.bf16.msra.mxu0 0
        %509 = vmatprep.subr.bf16.mxu0 0
        %510 = vmatpush2.bf16.msra.mxu0 0
        %511 = vmatprep.subr.bf16.mxu0 0
        %512 = vmatpush2.bf16.msra.mxu0 0
        %513 = vmatprep.subr.bf16.mxu0 0
        %514 = vmatpush2.bf16.msra.mxu0 0
        %515 = vmatprep.subr.bf16.mxu0 0
        %516 = vmatpush2.bf16.msra.mxu0 0
        %517 = vmatprep.subr.bf16.mxu0 0
        %518 = vmatpush2.bf16.msra.mxu0 0
        %519 = vmatprep.subr.bf16.mxu0 0
        %520 = vmatpush2.bf16.msra.mxu0 0
        %521 = vmatprep.subr.bf16.mxu0 0
        %522 = vmatpush2.bf16.msra.mxu0 0
        %523 = vmatprep.mubr.bf16.mxu0 0
        %524 = vmatmul.mubr.bf16.gmra.mxu0 %v482
        %v525 = vpop.f32.mrf.mxu0
        %v526 = vadd.f32 0.0, %v525
        %v527 = vpop.f32.mrf.mxu0
        %v528 = vpop.f32.mrf.mxu0
        %v529 = vadd.f32 0.0, %v528
        %v530 = vpop.f32.mrf.mxu0
        %531 = vmatprep.mubr.bf16.mxu0 0
        %532 = vmatmul.mubr.bf16.gmra.mxu0 %v485
        %v533 = vpop.f32.mrf.mxu0
        %v534 = vadd.f32 0.0, %v533
        %v535 = vpop.f32.mrf.mxu0
        %v536 = vpop.f32.mrf.mxu0
        %v537 = vadd.f32 0.0, %v536
        %v538 = vpop.f32.mrf.mxu0
        %539 = vdwg.mxu0
        %v540 = vmul.f32 %v526, %v224
        %v541 = vmul.f32 %v529, %v225
        %v542 = vmul.f32 %v534, %v226
        %v543 = vmul.f32 %v537, %v227
        %v544 = vpack.c.bf16 %v541, %v540
        %v545 = vpack.c.bf16 %v543, %v542
        %v547 = vsel %vm487, %v469, 0
        %549 = vmatprep.subr.bf16.mxu0 0
        %550 = vmatpush1.bf16.msra.mxu0 0
        %551 = vmatprep.subr.bf16.mxu0 0
        %552 = vmatpush1.bf16.msra.mxu0 0
        %553 = vmatprep.subr.bf16.mxu0 0
        %554 = vmatpush1.bf16.msra.mxu0 0
        %555 = vmatprep.subr.bf16.mxu0 0
        %556 = vmatpush1.bf16.msra.mxu0 0
        %557 = vmatprep.subr.bf16.mxu0 0
        %558 = vmatpush1.bf16.msra.mxu0 0
        %559 = vmatprep.subr.bf16.mxu0 0
        %560 = vmatpush1.bf16.msra.mxu0 0
        %561 = vmatprep.subr.bf16.mxu0 0
        %562 = vmatpush1.bf16.msra.mxu0 0
        %563 = vmatprep.subr.bf16.mxu0 0
        %564 = vmatpush1.bf16.msra.mxu0 %v547
        %565 = vmatprep.subr.bf16.mxu0 0
        %566 = vmatpush2.bf16.msra.mxu0 0
        %567 = vmatprep.subr.bf16.mxu0 0
        %568 = vmatpush2.bf16.msra.mxu0 0
        %569 = vmatprep.subr.bf16.mxu0 0
        %570 = vmatpush2.bf16.msra.mxu0 0
        %571 = vmatprep.subr.bf16.mxu0 0
        %572 = vmatpush2.bf16.msra.mxu0 0
        %573 = vmatprep.subr.bf16.mxu0 0
        %574 = vmatpush2.bf16.msra.mxu0 0
        %575 = vmatprep.subr.bf16.mxu0 0
        %576 = vmatpush2.bf16.msra.mxu0 0
        %577 = vmatprep.subr.bf16.mxu0 0
        %578 = vmatpush2.bf16.msra.mxu0 0
        %579 = vmatprep.subr.bf16.mxu0 0
        %580 = vmatpush2.bf16.msra.mxu0 0
        %581 = vmatprep.mubr.bf16.mxu0 0
        %582 = vmatmul.mubr.bf16.gmra.mxu0 %v482
        %v583 = vpop.f32.mrf.mxu0
        %v584 = vadd.f32 0.0, %v583
        %v585 = vpop.f32.mrf.mxu0
        %v586 = vpop.f32.mrf.mxu0
        %v587 = vadd.f32 0.0, %v586
        %v588 = vpop.f32.mrf.mxu0
        %589 = vmatprep.mubr.bf16.mxu0 0
        %590 = vmatmul.mubr.bf16.gmra.mxu0 %v485
        %v591 = vpop.f32.mrf.mxu0
        %v592 = vadd.f32 0.0, %v591
        %v593 = vpop.f32.mrf.mxu0
        %v594 = vpop.f32.mrf.mxu0
        %v595 = vadd.f32 0.0, %v594
        %v596 = vpop.f32.mrf.mxu0
        %597 = vdwg.mxu0
        %v598 = vmul.f32 %v584, %v224
        %v599 = vmul.f32 %v587, %v225
        %v600 = vmul.f32 %v592, %v226
        %v601 = vmul.f32 %v595, %v227
        %v602 = vpack.c.bf16 %v599, %v598
        %v603 = vpack.c.bf16 %v601, %v600
        %v605 = vsel %vm280, %v355, 0
        %v608 = vsel %vm280, %v544, 0
        %v611 = vsel %vm280, %v545, 0
        %613 = vmatprep.subr.bf16.mxu0 0
        %614 = vmatpush1.bf16.xpose.msra.mxu0 0
        %615 = vmatprep.subr.bf16.mxu0 0
        %616 = vmatpush1.bf16.xpose.msra.mxu0 0
        %617 = vmatprep.subr.bf16.mxu0 0
        %618 = vmatpush1.bf16.xpose.msra.mxu0 0
        %619 = vmatprep.subr.bf16.mxu0 0
        %620 = vmatpush1.bf16.xpose.msra.mxu0 0
        %621 = vmatprep.subr.bf16.mxu0 0
        %622 = vmatpush1.bf16.xpose.msra.mxu0 0
        %623 = vmatprep.subr.bf16.mxu0 0
        %624 = vmatpush1.bf16.xpose.msra.mxu0 0
        %625 = vmatprep.subr.bf16.mxu0 0
        %626 = vmatpush1.bf16.xpose.msra.mxu0 %v611
        %627 = vmatprep.subr.bf16.mxu0 0
        %628 = vmatpush1.bf16.xpose.msra.mxu0 %v608
        %629 = vmatprep.subr.bf16.mxu0 0
        %630 = vmatpush2.bf16.xpose.msra.mxu0 0
        %631 = vmatprep.subr.bf16.mxu0 0
        %632 = vmatpush2.bf16.xpose.msra.mxu0 0
        %633 = vmatprep.subr.bf16.mxu0 0
        %634 = vmatpush2.bf16.xpose.msra.mxu0 0
        %635 = vmatprep.subr.bf16.mxu0 0
        %636 = vmatpush2.bf16.xpose.msra.mxu0 0
        %637 = vmatprep.subr.bf16.mxu0 0
        %638 = vmatpush2.bf16.xpose.msra.mxu0 0
        %639 = vmatprep.subr.bf16.mxu0 0
        %640 = vmatpush2.bf16.xpose.msra.mxu0 0
        %641 = vmatprep.subr.bf16.mxu0 0
        %642 = vmatpush2.bf16.xpose.msra.mxu0 0
        %643 = vmatprep.subr.bf16.mxu0 0
        %644 = vmatpush2.bf16.xpose.msra.mxu0 0
        %645 = vmatprep.mubr.bf16.mxu0 0
        %646 = vmatmul.mubr.bf16.gmra.mxu0 %v605
        %v647 = vpop.f32.mrf.mxu0
        %v648 = vadd.f32 %v223, %v647
        %v649 = vpop.f32.mrf.mxu0
        %v650 = vpop.f32.mrf.mxu0
        %v651 = vpop.f32.mrf.mxu0
        %652 = vdwg.mxu0
        %v653 = vsel %vm280, %v648, -inf
        %654 = vmax.xlane.f32.xlu0 %v653
        %v655 = vpop.xlane.xlu0 %654
        %v656 = vsub.f32 %v648, %v655
        %v657 = vmul.f32 %v656, 1.442695
        %v658 = vpow.pop %v657
        %v659 = vpack.c.bf16 %v658, %v658
        %v664 = vunpack.c.l.b16 %v232
        %v665 = vunpack.c.l.b16 %v233
        %v666 = vunpack.c.l.b16 %v234
        %v667 = vunpack.c.l.b16 %v235
        %v668 = vpack.c.b16 %v665, %v664
        %v669 = vpack.c.b16 %v667, %v666
        %v673 = vsel %vm280, %v659, 0
        %675 = vmatprep.subr.bf16.mxu0 0
        %676 = vmatpush1.bf16.msra.mxu0 0
        %677 = vmatprep.subr.bf16.mxu0 0
        %678 = vmatpush1.bf16.msra.mxu0 0
        %679 = vmatprep.subr.bf16.mxu0 0
        %680 = vmatpush1.bf16.msra.mxu0 0
        %681 = vmatprep.subr.bf16.mxu0 0
        %682 = vmatpush1.bf16.msra.mxu0 0
        %683 = vmatprep.subr.bf16.mxu0 0
        %684 = vmatpush1.bf16.msra.mxu0 0
        %685 = vmatprep.subr.bf16.mxu0 0
        %686 = vmatpush1.bf16.msra.mxu0 0
        %687 = vmatprep.subr.bf16.mxu0 0
        %688 = vmatpush1.bf16.msra.mxu0 %v669
        %689 = vmatprep.subr.bf16.mxu0 0
        %690 = vmatpush1.bf16.msra.mxu0 %v668
        %691 = vmatprep.subr.bf16.mxu0 0
        %692 = vmatpush2.bf16.msra.mxu0 0
        %693 = vmatprep.subr.bf16.mxu0 0
        %694 = vmatpush2.bf16.msra.mxu0 0
        %695 = vmatprep.subr.bf16.mxu0 0
        %696 = vmatpush2.bf16.msra.mxu0 0
        %697 = vmatprep.subr.bf16.mxu0 0
        %698 = vmatpush2.bf16.msra.mxu0 0
        %699 = vmatprep.subr.bf16.mxu0 0
        %700 = vmatpush2.bf16.msra.mxu0 0
        %701 = vmatprep.subr.bf16.mxu0 0
        %702 = vmatpush2.bf16.msra.mxu0 0
        %703 = vmatprep.subr.bf16.mxu0 0
        %704 = vmatpush2.bf16.msra.mxu0 0
        %705 = vmatprep.subr.bf16.mxu0 0
        %706 = vmatpush2.bf16.msra.mxu0 0
        %707 = vmatprep.mubr.bf16.mxu0 0
        %708 = vmatmul.mubr.bf16.gmra.mxu0 %v673
        %v709 = vpop.f32.mrf.mxu0
        %v710 = vadd.f32 0.0, %v709
        %v711 = vpop.f32.mrf.mxu0
        %v712 = vpop.f32.mrf.mxu0
        %v713 = vpop.f32.mrf.mxu0
        %714 = vdwg.mxu0
        %v715 = vmax.f32 %v710, 1e-20
        %v716 = vrcp.pop %v715
        %v717 = vmul.f32 %v658, %v716
        %v718 = vpack.c.bf16 %v717, %v717
        %v720 = vsel %vm280, %v718, 0
        %722 = vmatprep.subr.bf16.mxu0 0
        %723 = vmatpush1.bf16.msra.mxu0 0
        %724 = vmatprep.subr.bf16.mxu0 0
        %725 = vmatpush1.bf16.msra.mxu0 0
        %726 = vmatprep.subr.bf16.mxu0 0
        %727 = vmatpush1.bf16.msra.mxu0 0
        %728 = vmatprep.subr.bf16.mxu0 0
        %729 = vmatpush1.bf16.msra.mxu0 0
        %730 = vmatprep.subr.bf16.mxu0 0
        %731 = vmatpush1.bf16.msra.mxu0 0
        %732 = vmatprep.subr.bf16.mxu0 0
        %733 = vmatpush1.bf16.msra.mxu0 0
        %734 = vmatprep.subr.bf16.mxu0 0
        %735 = vmatpush1.bf16.msra.mxu0 %v603
        %736 = vmatprep.subr.bf16.mxu0 0
        %737 = vmatpush1.bf16.msra.mxu0 %v602
        %738 = vmatprep.subr.bf16.mxu0 0
        %739 = vmatpush2.bf16.msra.mxu0 0
        %740 = vmatprep.subr.bf16.mxu0 0
        %741 = vmatpush2.bf16.msra.mxu0 0
        %742 = vmatprep.subr.bf16.mxu0 0
        %743 = vmatpush2.bf16.msra.mxu0 0
        %744 = vmatprep.subr.bf16.mxu0 0
        %745 = vmatpush2.bf16.msra.mxu0 0
        %746 = vmatprep.subr.bf16.mxu0 0
        %747 = vmatpush2.bf16.msra.mxu0 0
        %748 = vmatprep.subr.bf16.mxu0 0
        %749 = vmatpush2.bf16.msra.mxu0 0
        %750 = vmatprep.subr.bf16.mxu0 0
        %751 = vmatpush2.bf16.msra.mxu0 0
        %752 = vmatprep.subr.bf16.mxu0 0
        %753 = vmatpush2.bf16.msra.mxu0 0
        %754 = vmatprep.mubr.bf16.mxu0 0
        %755 = vmatmul.mubr.bf16.gmra.mxu0 %v720
        %v756 = vpop.f32.mrf.mxu0
        %v757 = vadd.f32 0.0, %v756
        %v758 = vpop.f32.mrf.mxu0
        %v759 = vpop.f32.mrf.mxu0
        %v760 = vpop.f32.mrf.mxu0
        %761 = vdwg.mxu0
        %v762 = vpack.c.bf16 %v757, %v757
        %v763 = vlaneseq
        %v764 = vshrl.u32 %v763, 7
        %v765 = vsub.s32 0, %v764
        %v766 = vrot.slane %v277, %v765
        %v771 = vunpack.c.l.b16 %v250
        %v772 = vunpack.c.l.b16 %v251
        %v773 = vunpack.c.l.b16 %v252
        %v774 = vunpack.c.l.b16 %v253
        %v775 = vpack.c.b16 %v772, %v771
        %v776 = vpack.c.b16 %v774, %v773
        %v780 = vsel %vm280, %v762, 0
        %782 = vmatprep.subr.bf16.mxu0 0
        %783 = vmatpush1.bf16.msra.mxu0 0
        %784 = vmatprep.subr.bf16.mxu0 0
        %785 = vmatpush1.bf16.msra.mxu0 0
        %786 = vmatprep.subr.bf16.mxu0 0
        %787 = vmatpush1.bf16.msra.mxu0 0
        %788 = vmatprep.subr.bf16.mxu0 0
        %789 = vmatpush1.bf16.msra.mxu0 0
        %790 = vmatprep.subr.bf16.mxu0 0
        %791 = vmatpush1.bf16.msra.mxu0 0
        %792 = vmatprep.subr.bf16.mxu0 0
        %793 = vmatpush1.bf16.msra.mxu0 0
        %794 = vmatprep.subr.bf16.mxu0 0
        %795 = vmatpush1.bf16.msra.mxu0 %v776
        %796 = vmatprep.subr.bf16.mxu0 0
        %797 = vmatpush1.bf16.msra.mxu0 %v775
        %798 = vmatprep.subr.bf16.mxu0 0
        %799 = vmatpush2.bf16.msra.mxu0 0
        %800 = vmatprep.subr.bf16.mxu0 0
        %801 = vmatpush2.bf16.msra.mxu0 0
        %802 = vmatprep.subr.bf16.mxu0 0
        %803 = vmatpush2.bf16.msra.mxu0 0
        %804 = vmatprep.subr.bf16.mxu0 0
        %805 = vmatpush2.bf16.msra.mxu0 0
        %806 = vmatprep.subr.bf16.mxu0 0
        %807 = vmatpush2.bf16.msra.mxu0 0
        %808 = vmatprep.subr.bf16.mxu0 0
        %809 = vmatpush2.bf16.msra.mxu0 0
        %810 = vmatprep.subr.bf16.mxu0 0
        %811 = vmatpush2.bf16.msra.mxu0 0
        %812 = vmatprep.subr.bf16.mxu0 0
        %813 = vmatpush2.bf16.msra.mxu0 0
        %814 = vmatprep.mubr.bf16.mxu0 0
        %815 = vmatmul.mubr.bf16.gmra.mxu0 %v780
        %v816 = vpop.f32.mrf.mxu0
        %v817 = vadd.f32 %v766, %v816
        %v818 = vpop.f32.mrf.mxu0
        %v819 = vpop.f32.mrf.mxu0
        %v820 = vpop.f32.mrf.mxu0
        %821 = vdwg.mxu0
        %v822 = vadd.f32 %v237, %v817
        %v823 = vsel %vm280, %v822, 0.0
        %824 = vadd.xlane.f32.xlu0 %v823
        %v825 = vpop.xlane.xlu0 %824
        %v826 = vmul.f32 %v825, %v284
        %v827 = vsub.f32 %v822, %v826
        %v828 = vmul.f32 %v827, %v827
        %v829 = vsel %vm280, %v828, 0.0
        %830 = vadd.xlane.f32.xlu0 %v829
        %v831 = vpop.xlane.xlu0 %830
        %v832 = vmul.f32 %v831, %v284
        %v833 = vadd.f32 %v832, 1e-05
        %v834 = vrsqrt.pop %v833
        %v835 = vmul.f32 %v827, %v834
        %v836 = vpack.c.bf16 %v835, %v835
        %v837 = vlaneseq
        %v838 = vshrl.u32 %v837, 7
        %v839 = vsub.s32 0, %v838
        %v840 = vrot.slane %v278, %v839
        %v845 = vunpack.c.l.b16 %v254
        %v846 = vunpack.c.l.b16 %v255
        %v847 = vunpack.c.l.b16 %v256
        %v848 = vunpack.c.l.b16 %v257
        %v849 = vpack.c.b16 %v846, %v845
        %v850 = vpack.c.b16 %v848, %v847
        %v854 = vsel %vm280, %v836, 0
        %856 = vmatprep.subr.bf16.mxu0 0
        %857 = vmatpush1.bf16.msra.mxu0 0
        %858 = vmatprep.subr.bf16.mxu0 0
        %859 = vmatpush1.bf16.msra.mxu0 0
        %860 = vmatprep.subr.bf16.mxu0 0
        %861 = vmatpush1.bf16.msra.mxu0 0
        %862 = vmatprep.subr.bf16.mxu0 0
        %863 = vmatpush1.bf16.msra.mxu0 0
        %864 = vmatprep.subr.bf16.mxu0 0
        %865 = vmatpush1.bf16.msra.mxu0 0
        %866 = vmatprep.subr.bf16.mxu0 0
        %867 = vmatpush1.bf16.msra.mxu0 0
        %868 = vmatprep.subr.bf16.mxu0 0
        %869 = vmatpush1.bf16.msra.mxu0 %v850
        %870 = vmatprep.subr.bf16.mxu0 0
        %871 = vmatpush1.bf16.msra.mxu0 %v849
        %872 = vmatprep.subr.bf16.mxu0 0
        %873 = vmatpush2.bf16.msra.mxu0 0
        %874 = vmatprep.subr.bf16.mxu0 0
        %875 = vmatpush2.bf16.msra.mxu0 0
        %876 = vmatprep.subr.bf16.mxu0 0
        %877 = vmatpush2.bf16.msra.mxu0 0
        %878 = vmatprep.subr.bf16.mxu0 0
        %879 = vmatpush2.bf16.msra.mxu0 0
        %880 = vmatprep.subr.bf16.mxu0 0
        %881 = vmatpush2.bf16.msra.mxu0 0
        %882 = vmatprep.subr.bf16.mxu0 0
        %883 = vmatpush2.bf16.msra.mxu0 0
        %884 = vmatprep.subr.bf16.mxu0 0
        %885 = vmatpush2.bf16.msra.mxu0 0
        %886 = vmatprep.subr.bf16.mxu0 0
        %887 = vmatpush2.bf16.msra.mxu0 0
        %888 = vmatprep.mubr.bf16.mxu0 0
        %889 = vmatmul.mubr.bf16.gmra.mxu0 %v854
        %v890 = vpop.f32.mrf.mxu0
        %v891 = vadd.f32 %v840, %v890
        %v892 = vpop.f32.mrf.mxu0
        %v893 = vpop.f32.mrf.mxu0
        %v894 = vpop.f32.mrf.mxu0
        %895 = vdwg.mxu0
        %v896 = vmul.f32 %v891, 1.702
        %v897 = vxor.u32 %v896, 2147483648
        %v898 = vmul.f32 %v897, 1.442695
        %v899 = vpow.pop %v898
        %v900 = vadd.f32 %v899, 1.0
        %v901 = vrcp.pop %v900
        %v902 = vmul.f32 1.0, %v901
        %v903 = vmul.f32 %v891, %v902
        %v904 = vpack.c.bf16 %v903, %v903
        %v921 = vunpack.c.l.b16 %v258
        %v922 = vunpack.c.l.b16 %v259
        %v923 = vunpack.c.l.b16 %v260
        %v924 = vunpack.c.l.b16 %v261
        %v925 = vunpack.c.l.b16 %v262
        %v926 = vunpack.c.l.b16 %v263
        %v927 = vunpack.c.l.b16 %v264
        %v928 = vunpack.c.l.b16 %v265
        %v929 = vunpack.c.l.b16 %v266
        %v930 = vunpack.c.l.b16 %v267
        %v931 = vunpack.c.l.b16 %v268
        %v932 = vunpack.c.l.b16 %v269
        %v933 = vunpack.c.l.b16 %v270
        %v934 = vunpack.c.l.b16 %v271
        %v935 = vunpack.c.l.b16 %v272
        %v936 = vunpack.c.l.b16 %v273
        %v937 = vpack.c.b16 %v922, %v921
        %v938 = vpack.c.b16 %v924, %v923
        %v939 = vpack.c.b16 %v926, %v925
        %v940 = vpack.c.b16 %v928, %v927
        %v941 = vpack.c.b16 %v930, %v929
        %v942 = vpack.c.b16 %v932, %v931
        %v943 = vpack.c.b16 %v934, %v933
        %v944 = vpack.c.b16 %v936, %v935
        %953 = vmatprep.subr.bf16.mxu0 0
        %954 = vmatpush1.bf16.msra.mxu0 %v944
        %955 = vmatprep.subr.bf16.mxu0 0
        %956 = vmatpush1.bf16.msra.mxu0 %v943
        %957 = vmatprep.subr.bf16.mxu0 0
        %958 = vmatpush1.bf16.msra.mxu0 %v942
        %959 = vmatprep.subr.bf16.mxu0 0
        %960 = vmatpush1.bf16.msra.mxu0 %v941
        %961 = vmatprep.subr.bf16.mxu0 0
        %962 = vmatpush1.bf16.msra.mxu0 %v940
        %963 = vmatprep.subr.bf16.mxu0 0
        %964 = vmatpush1.bf16.msra.mxu0 %v939
        %965 = vmatprep.subr.bf16.mxu0 0
        %966 = vmatpush1.bf16.msra.mxu0 %v938
        %967 = vmatprep.subr.bf16.mxu0 0
        %968 = vmatpush1.bf16.msra.mxu0 %v937
        %969 = vmatprep.subr.bf16.mxu0 0
        %970 = vmatpush2.bf16.msra.mxu0 0
        %971 = vmatprep.subr.bf16.mxu0 0
        %972 = vmatpush2.bf16.msra.mxu0 0
        %973 = vmatprep.subr.bf16.mxu0 0
        %974 = vmatpush2.bf16.msra.mxu0 0
        %975 = vmatprep.subr.bf16.mxu0 0
        %976 = vmatpush2.bf16.msra.mxu0 0
        %977 = vmatprep.subr.bf16.mxu0 0
        %978 = vmatpush2.bf16.msra.mxu0 0
        %979 = vmatprep.subr.bf16.mxu0 0
        %980 = vmatpush2.bf16.msra.mxu0 0
        %981 = vmatprep.subr.bf16.mxu0 0
        %982 = vmatpush2.bf16.msra.mxu0 0
        %983 = vmatprep.subr.bf16.mxu0 0
        %984 = vmatpush2.bf16.msra.mxu0 0
        %985 = vmatprep.mubr.bf16.mxu0 0
        %986 = vmatmul.mubr.bf16.gmra.mxu0 %v904
        %v987 = vpop.f32.mrf.mxu0
        %v988 = vadd.f32 0.0, %v987
        %v989 = vpop.f32.mrf.mxu0
        %v990 = vpop.f32.mrf.mxu0
        %v991 = vpop.f32.mrf.mxu0
        %992 = vdwg.mxu0
        %v993 = vadd.f32 %v822, %v988
        %v994 = vlaneseq
        %v995 = vshrl.u32 %v994, 7
        %v996 = vsub.s32 0, %v995
        %v997 = vrot.slane %v279, %v996
        %v998 = vadd.f32 %v993, %v997
        %v999 = vld [vmem:[#allocation7 + $0x90] sm:$0xf]
        %v1000 = vld [vmem:[#allocation7 + $0x94] sm:$0xf]
        %v1001 = vld [vmem:[#allocation7 + $0x98] sm:$0xf]
        %v1002 = vld [vmem:[#allocation7 + $0x9c] sm:$0xf]
        %v1003 = vld [vmem:[#allocation7 + $0xa0] sm:$0xf]
        %v1004 = vld [vmem:[#allocation7 + $0xa4] sm:$0xf]
        %v1005 = vld [vmem:[#allocation7 + $0xa8] sm:$0xf]
        %v1006 = vld [vmem:[#allocation7 + $0xac] sm:$0xf]
        %v1007 = vld [vmem:[#allocation7 + $0xb0] sm:$0xf]
        %v1008 = vld [vmem:[#allocation7 + $0xb4] sm:$0xf]
        %v1009 = vld [vmem:[#allocation7 + $0xb8] sm:$0xf]
        %v1010 = vld [vmem:[#allocation7 + $0xbc] sm:$0xf]
        %v1011 = vld [vmem:[#allocation7 + $0xc0] sm:$0xf]
        %v1012 = vld [vmem:[#allocation7 + $0xc4] sm:$0xf]
        %v1013 = vld [vmem:[#allocation7 + $0xc8] sm:$0xf]
        %v1014 = vld [vmem:[#allocation7 + $0xcc] sm:$0xf]
        %v1015 = vld [vmem:[#allocation7 + $0xd0] sm:$0xf]
        %v1016 = vld [vmem:[#allocation7 + $0xd4] sm:$0xf]
        %v1017 = vld [vmem:[#allocation7 + $0xd8] sm:$0xf]
        %v1018 = vld [vmem:[#allocation7 + $0xdc] sm:$0xf]
        %v1019 = vld [vmem:[#allocation7 + $0xe0] sm:$0xf]
        %v1020 = vld [vmem:[#allocation7 + $0xe4] sm:$0xf]
        %v1021 = vld [vmem:[#allocation7 + $0xe8] sm:$0xf]
        %v1022 = vld [vmem:[#allocation7 + $0xec] sm:$0xf]
        %v1023 = vld [vmem:[#allocation7 + $0xf0] sm:$0xf]
        %v1024 = vld [vmem:[#allocation7 + $0xf4] sm:$0xf]
        %v1025 = vld [vmem:[#allocation7 + $0xf8] sm:$0xf]
        %v1026 = vld [vmem:[#allocation7 + $0xfc] sm:$0xf]
        %v1027 = vld [vmem:[#allocation7 + $0x100] sm:$0xf]
        %v1028 = vld [vmem:[#allocation7 + $0x104] sm:$0xf]
        %v1029 = vld [vmem:[#allocation7 + $0x108] sm:$0xf]
        %v1030 = vld [vmem:[#allocation7 + $0x10c] sm:$0xf]
        %v1031 = vld [vmem:[#allocation7 + $0x110] sm:$0xf]
        %v1032 = vld [vmem:[#allocation7 + $0x114] sm:$0xf]
        %v1033 = vld [vmem:[#allocation7 + $0x118] sm:$0xf]
        %v1034 = vld [vmem:[#allocation7 + $0x11c] sm:$0xf]
        %v1035 = vld [vmem:[#allocation9 + $0x38] sm:$0x1]
        %v1036 = vld [vmem:[#allocation9 + $0x39] sm:$0x1]
        %v1037 = vld [vmem:[#allocation9 + $0x3a] sm:$0x1]
        %v1038 = vld [vmem:[#allocation9 + $0x3b] sm:$0x1]
        %v1039 = vld [vmem:[#allocation9 + $0x3c] sm:$0x1]
        %v1040 = vld [vmem:[#allocation9 + $0x3d] sm:$0x1]
        %v1041 = vsel %vm280, %v998, 0.0
        %1042 = vadd.xlane.f32.xlu0 %v1041
        %v1043 = vpop.xlane.xlu0 %1042
        %v1044 = vmul.f32 %v1043, %v284
        %v1045 = vsub.f32 %v998, %v1044
        %v1046 = vmul.f32 %v1045, %v1045
        %v1047 = vsel %vm280, %v1046, 0.0
        %1048 = vadd.xlane.f32.xlu0 %v1047
        %v1049 = vpop.xlane.xlu0 %1048
        %v1050 = vmul.f32 %v1049, %v284
        %v1051 = vadd.f32 %v1050, 1e-05
        %v1052 = vrsqrt.pop %v1051
        %v1053 = vmul.f32 %v1045, %v1052
        %v1054 = vpack.c.bf16 %v1053, %v1053
        %v1055 = vlaneseq
        %v1056 = vshrl.u32 %v1055, 7
        %v1057 = vsub.s32 0, %v1056
        %v1058 = vrot.slane %v1035, %v1057
        %v1063 = vunpack.c.l.b16 %v999
        %v1064 = vunpack.c.l.b16 %v1000
        %v1065 = vunpack.c.l.b16 %v1001
        %v1066 = vunpack.c.l.b16 %v1002
        %v1067 = vpack.c.b16 %v1064, %v1063
        %v1068 = vpack.c.b16 %v1066, %v1065
        %v1072 = vsel %vm280, %v1054, 0
        %1074 = vmatprep.subr.bf16.mxu0 0
        %1075 = vmatpush1.bf16.msra.mxu0 0
        %1076 = vmatprep.subr.bf16.mxu0 0
        %1077 = vmatpush1.bf16.msra.mxu0 0
        %1078 = vmatprep.subr.bf16.mxu0 0
        %1079 = vmatpush1.bf16.msra.mxu0 0
        %1080 = vmatprep.subr.bf16.mxu0 0
        %1081 = vmatpush1.bf16.msra.mxu0 0
        %1082 = vmatprep.subr.bf16.mxu0 0
        %1083 = vmatpush1.bf16.msra.mxu0 0
        %1084 = vmatprep.subr.bf16.mxu0 0
        %1085 = vmatpush1.bf16.msra.mxu0 0
        %1086 = vmatprep.subr.bf16.mxu0 0
        %1087 = vmatpush1.bf16.msra.mxu0 %v1068
        %1088 = vmatprep.subr.bf16.mxu0 0
        %1089 = vmatpush1.bf16.msra.mxu0 %v1067
        %1090 = vmatprep.subr.bf16.mxu0 0
        %1091 = vmatpush2.bf16.msra.mxu0 0
        %1092 = vmatprep.subr.bf16.mxu0 0
        %1093 = vmatpush2.bf16.msra.mxu0 0
        %1094 = vmatprep.subr.bf16.mxu0 0
        %1095 = vmatpush2.bf16.msra.mxu0 0
        %1096 = vmatprep.subr.bf16.mxu0 0
        %1097 = vmatpush2.bf16.msra.mxu0 0
        %1098 = vmatprep.subr.bf16.mxu0 0
        %1099 = vmatpush2.bf16.msra.mxu0 0
        %1100 = vmatprep.subr.bf16.mxu0 0
        %1101 = vmatpush2.bf16.msra.mxu0 0
        %1102 = vmatprep.subr.bf16.mxu0 0
        %1103 = vmatpush2.bf16.msra.mxu0 0
        %1104 = vmatprep.subr.bf16.mxu0 0
        %1105 = vmatpush2.bf16.msra.mxu0 0
        %1106 = vmatprep.mubr.bf16.mxu0 0
        %1107 = vmatmul.mubr.bf16.gmra.mxu0 %v1072
        %v1108 = vpop.f32.mrf.mxu0
        %v1109 = vadd.f32 %v1058, %v1108
        %v1110 = vpop.f32.mrf.mxu0
        %v1111 = vpop.f32.mrf.mxu0
        %v1112 = vpop.f32.mrf.mxu0
        %1113 = vdwg.mxu0
        %v1114 = vpack.c.bf16 %v1109, %v1109
        %v1115 = vlaneseq
        %v1116 = vshrl.u32 %v1115, 7
        %v1117 = vsub.s32 0, %v1116
        %v1118 = vrot.slane %v1036, %v1117
        %v1123 = vunpack.c.l.b16 %v1003
        %v1124 = vunpack.c.l.b16 %v1004
        %v1125 = vunpack.c.l.b16 %v1005
        %v1126 = vunpack.c.l.b16 %v1006
        %v1127 = vpack.c.b16 %v1124, %v1123
        %v1128 = vpack.c.b16 %v1126, %v1125
        %1131 = vmatprep.subr.bf16.mxu0 0
        %1132 = vmatpush1.bf16.msra.mxu0 0
        %1133 = vmatprep.subr.bf16.mxu0 0
        %1134 = vmatpush1.bf16.msra.mxu0 0
        %1135 = vmatprep.subr.bf16.mxu0 0
        %1136 = vmatpush1.bf16.msra.mxu0 0
        %1137 = vmatprep.subr.bf16.mxu0 0
        %1138 = vmatpush1.bf16.msra.mxu0 0
        %1139 = vmatprep.subr.bf16.mxu0 0
        %1140 = vmatpush1.bf16.msra.mxu0 0
        %1141 = vmatprep.subr.bf16.mxu0 0
        %1142 = vmatpush1.bf16.msra.mxu0 0
        %1143 = vmatprep.subr.bf16.mxu0 0
        %1144 = vmatpush1.bf16.msra.mxu0 %v1128
        %1145 = vmatprep.subr.bf16.mxu0 0
        %1146 = vmatpush1.bf16.msra.mxu0 %v1127
        %1147 = vmatprep.subr.bf16.mxu0 0
        %1148 = vmatpush2.bf16.msra.mxu0 0
        %1149 = vmatprep.subr.bf16.mxu0 0
        %1150 = vmatpush2.bf16.msra.mxu0 0
        %1151 = vmatprep.subr.bf16.mxu0 0
        %1152 = vmatpush2.bf16.msra.mxu0 0
        %1153 = vmatprep.subr.bf16.mxu0 0
        %1154 = vmatpush2.bf16.msra.mxu0 0
        %1155 = vmatprep.subr.bf16.mxu0 0
        %1156 = vmatpush2.bf16.msra.mxu0 0
        %1157 = vmatprep.subr.bf16.mxu0 0
        %1158 = vmatpush2.bf16.msra.mxu0 0
        %1159 = vmatprep.subr.bf16.mxu0 0
        %1160 = vmatpush2.bf16.msra.mxu0 0
        %1161 = vmatprep.subr.bf16.mxu0 0
        %1162 = vmatpush2.bf16.msra.mxu0 0
        %1163 = vmatprep.mubr.bf16.mxu0 0
        %1164 = vmatmul.mubr.bf16.gmra.mxu0 %v1072
        %v1165 = vpop.f32.mrf.mxu0
        %v1166 = vadd.f32 %v1118, %v1165
        %v1167 = vpop.f32.mrf.mxu0
        %v1168 = vpop.f32.mrf.mxu0
        %v1169 = vpop.f32.mrf.mxu0
        %1170 = vdwg.mxu0
        %v1171 = vpack.c.bf16 %v1166, %v1166
        %v1172 = vlaneseq
        %v1173 = vshrl.u32 %v1172, 7
        %v1174 = vsub.s32 0, %v1173
        %v1175 = vrot.slane %v1037, %v1174
        %v1180 = vunpack.c.l.b16 %v1007
        %v1181 = vunpack.c.l.b16 %v1008
        %v1182 = vunpack.c.l.b16 %v1009
        %v1183 = vunpack.c.l.b16 %v1010
        %v1184 = vpack.c.b16 %v1181, %v1180
        %v1185 = vpack.c.b16 %v1183, %v1182
        %1188 = vmatprep.subr.bf16.mxu0 0
        %1189 = vmatpush1.bf16.msra.mxu0 0
        %1190 = vmatprep.subr.bf16.mxu0 0
        %1191 = vmatpush1.bf16.msra.mxu0 0
        %1192 = vmatprep.subr.bf16.mxu0 0
        %1193 = vmatpush1.bf16.msra.mxu0 0
        %1194 = vmatprep.subr.bf16.mxu0 0
        %1195 = vmatpush1.bf16.msra.mxu0 0
        %1196 = vmatprep.subr.bf16.mxu0 0
        %1197 = vmatpush1.bf16.msra.mxu0 0
        %1198 = vmatprep.subr.bf16.mxu0 0
        %1199 = vmatpush1.bf16.msra.mxu0 0
        %1200 = vmatprep.subr.bf16.mxu0 0
        %1201 = vmatpush1.bf16.msra.mxu0 %v1185
        %1202 = vmatprep.subr.bf16.mxu0 0
        %1203 = vmatpush1.bf16.msra.mxu0 %v1184
        %1204 = vmatprep.subr.bf16.mxu0 0
        %1205 = vmatpush2.bf16.msra.mxu0 0
        %1206 = vmatprep.subr.bf16.mxu0 0
        %1207 = vmatpush2.bf16.msra.mxu0 0
        %1208 = vmatprep.subr.bf16.mxu0 0
        %1209 = vmatpush2.bf16.msra.mxu0 0
        %1210 = vmatprep.subr.bf16.mxu0 0
        %1211 = vmatpush2.bf16.msra.mxu0 0
        %1212 = vmatprep.subr.bf16.mxu0 0
        %1213 = vmatpush2.bf16.msra.mxu0 0
        %1214 = vmatprep.subr.bf16.mxu0 0
        %1215 = vmatpush2.bf16.msra.mxu0 0
        %1216 = vmatprep.subr.bf16.mxu0 0
        %1217 = vmatpush2.bf16.msra.mxu0 0
        %1218 = vmatprep.subr.bf16.mxu0 0
        %1219 = vmatpush2.bf16.msra.mxu0 0
        %1220 = vmatprep.mubr.bf16.mxu0 0
        %1221 = vmatmul.mubr.bf16.gmra.mxu0 %v1072
        %v1222 = vpop.f32.mrf.mxu0
        %v1223 = vadd.f32 %v1175, %v1222
        %v1224 = vpop.f32.mrf.mxu0
        %v1225 = vpop.f32.mrf.mxu0
        %v1226 = vpop.f32.mrf.mxu0
        %1227 = vdwg.mxu0
        %v1228 = vpack.c.bf16 %v1223, %v1223
        %v1230 = vsel %vm487, %v1171, 0
        %1232 = vmatprep.subr.bf16.mxu0 0
        %1233 = vmatpush1.bf16.msra.mxu0 0
        %1234 = vmatprep.subr.bf16.mxu0 0
        %1235 = vmatpush1.bf16.msra.mxu0 0
        %1236 = vmatprep.subr.bf16.mxu0 0
        %1237 = vmatpush1.bf16.msra.mxu0 0
        %1238 = vmatprep.subr.bf16.mxu0 0
        %1239 = vmatpush1.bf16.msra.mxu0 0
        %1240 = vmatprep.subr.bf16.mxu0 0
        %1241 = vmatpush1.bf16.msra.mxu0 0
        %1242 = vmatprep.subr.bf16.mxu0 0
        %1243 = vmatpush1.bf16.msra.mxu0 0
        %1244 = vmatprep.subr.bf16.mxu0 0
        %1245 = vmatpush1.bf16.msra.mxu0 0
        %1246 = vmatprep.subr.bf16.mxu0 0
        %1247 = vmatpush1.bf16.msra.mxu0 %v1230
        %1248 = vmatprep.subr.bf16.mxu0 0
        %1249 = vmatpush2.bf16.msra.mxu0 0
        %1250 = vmatprep.subr.bf16.mxu0 0
        %1251 = vmatpush2.bf16.msra.mxu0 0
        %1252 = vmatprep.subr.bf16.mxu0 0
        %1253 = vmatpush2.bf16.msra.mxu0 0
        %1254 = vmatprep.subr.bf16.mxu0 0
        %1255 = vmatpush2.bf16.msra.mxu0 0
        %1256 = vmatprep.subr.bf16.mxu0 0
        %1257 = vmatpush2.bf16.msra.mxu0 0
        %1258 = vmatprep.subr.bf16.mxu0 0
        %1259 = vmatpush2.bf16.msra.mxu0 0
        %1260 = vmatprep.subr.bf16.mxu0 0
        %1261 = vmatpush2.bf16.msra.mxu0 0
        %1262 = vmatprep.subr.bf16.mxu0 0
        %1263 = vmatpush2.bf16.msra.mxu0 0
        %1264 = vmatprep.mubr.bf16.mxu0 0
        %1265 = vmatmul.mubr.bf16.gmra.mxu0 %v482
        %v1266 = vpop.f32.mrf.mxu0
        %v1267 = vadd.f32 0.0, %v1266
        %v1268 = vpop.f32.mrf.mxu0
        %v1269 = vpop.f32.mrf.mxu0
        %v1270 = vadd.f32 0.0, %v1269
        %v1271 = vpop.f32.mrf.mxu0
        %1272 = vmatprep.mubr.bf16.mxu0 0
        %1273 = vmatmul.mubr.bf16.gmra.mxu0 %v485
        %v1274 = vpop.f32.mrf.mxu0
        %v1275 = vadd.f32 0.0, %v1274
        %v1276 = vpop.f32.mrf.mxu0
        %v1277 = vpop.f32.mrf.mxu0
        %v1278 = vadd.f32 0.0, %v1277
        %v1279 = vpop.f32.mrf.mxu0
        %1280 = vdwg.mxu0
        %v1281 = vmul.f32 %v1267, %v224
        %v1282 = vmul.f32 %v1270, %v225
        %v1283 = vmul.f32 %v1275, %v226
        %v1284 = vmul.f32 %v1278, %v227
        %v1285 = vpack.c.bf16 %v1282, %v1281
        %v1286 = vpack.c.bf16 %v1284, %v1283
        %v1288 = vsel %vm487, %v1228, 0
        %1290 = vmatprep.subr.bf16.mxu0 0
        %1291 = vmatpush1.bf16.msra.mxu0 0
        %1292 = vmatprep.subr.bf16.mxu0 0
        %1293 = vmatpush1.bf16.msra.mxu0 0
        %1294 = vmatprep.subr.bf16.mxu0 0
        %1295 = vmatpush1.bf16.msra.mxu0 0
        %1296 = vmatprep.subr.bf16.mxu0 0
        %1297 = vmatpush1.bf16.msra.mxu0 0
        %1298 = vmatprep.subr.bf16.mxu0 0
        %1299 = vmatpush1.bf16.msra.mxu0 0
        %1300 = vmatprep.subr.bf16.mxu0 0
        %1301 = vmatpush1.bf16.msra.mxu0 0
        %1302 = vmatprep.subr.bf16.mxu0 0
        %1303 = vmatpush1.bf16.msra.mxu0 0
        %1304 = vmatprep.subr.bf16.mxu0 0
        %1305 = vmatpush1.bf16.msra.mxu0 %v1288
        %1306 = vmatprep.subr.bf16.mxu0 0
        %1307 = vmatpush2.bf16.msra.mxu0 0
        %1308 = vmatprep.subr.bf16.mxu0 0
        %1309 = vmatpush2.bf16.msra.mxu0 0
        %1310 = vmatprep.subr.bf16.mxu0 0
        %1311 = vmatpush2.bf16.msra.mxu0 0
        %1312 = vmatprep.subr.bf16.mxu0 0
        %1313 = vmatpush2.bf16.msra.mxu0 0
        %1314 = vmatprep.subr.bf16.mxu0 0
        %1315 = vmatpush2.bf16.msra.mxu0 0
        %1316 = vmatprep.subr.bf16.mxu0 0
        %1317 = vmatpush2.bf16.msra.mxu0 0
        %1318 = vmatprep.subr.bf16.mxu0 0
        %1319 = vmatpush2.bf16.msra.mxu0 0
        %1320 = vmatprep.subr.bf16.mxu0 0
        %1321 = vmatpush2.bf16.msra.mxu0 0
        %1322 = vmatprep.mubr.bf16.mxu0 0
        %1323 = vmatmul.mubr.bf16.gmra.mxu0 %v482
        %v1324 = vpop.f32.mrf.mxu0
        %v1325 = vadd.f32 0.0, %v1324
        %v1326 = vpop.f32.mrf.mxu0
        %v1327 = vpop.f32.mrf.mxu0
        %v1328 = vadd.f32 0.0, %v1327
        %v1329 = vpop.f32.mrf.mxu0
        %1330 = vmatprep.mubr.bf16.mxu0 0
        %1331 = vmatmul.mubr.bf16.gmra.mxu0 %v485
        %v1332 = vpop.f32.mrf.mxu0
        %v1333 = vadd.f32 0.0, %v1332
        %v1334 = vpop.f32.mrf.mxu0
        %v1335 = vpop.f32.mrf.mxu0
        %v1336 = vadd.f32 0.0, %v1335
        %v1337 = vpop.f32.mrf.mxu0
        %1338 = vdwg.mxu0
        %v1339 = vmul.f32 %v1325, %v224
        %v1340 = vmul.f32 %v1328, %v225
        %v1341 = vmul.f32 %v1333, %v226
        %v1342 = vmul.f32 %v1336, %v227
        %v1343 = vpack.c.bf16 %v1340, %v1339
        %v1344 = vpack.c.bf16 %v1342, %v1341
        %v1346 = vsel %vm280, %v1114, 0
        %v1349 = vsel %vm280, %v1285, 0
        %v1352 = vsel %vm280, %v1286, 0
        %1354 = vmatprep.subr.bf16.mxu0 0
        %1355 = vmatpush1.bf16.xpose.msra.mxu0 0
        %1356 = vmatprep.subr.bf16.mxu0 0
        %1357 = vmatpush1.bf16.xpose.msra.mxu0 0
        %1358 = vmatprep.subr.bf16.mxu0 0
        %1359 = vmatpush1.bf16.xpose.msra.mxu0 0
        %1360 = vmatprep.subr.bf16.mxu0 0
        %1361 = vmatpush1.bf16.xpose.msra.mxu0 0
        %1362 = vmatprep.subr.bf16.mxu0 0
        %1363 = vmatpush1.bf16.xpose.msra.mxu0 0
        %1364 = vmatprep.subr.bf16.mxu0 0
        %1365 = vmatpush1.bf16.xpose.msra.mxu0 0
        %1366 = vmatprep.subr.bf16.mxu0 0
        %1367 = vmatpush1.bf16.xpose.msra.mxu0 %v1352
        %1368 = vmatprep.subr.bf16.mxu0 0
        %1369 = vmatpush1.bf16.xpose.msra.mxu0 %v1349
        %1370 = vmatprep.subr.bf16.mxu0 0
        %1371 = vmatpush2.bf16.xpose.msra.mxu0 0
        %1372 = vmatprep.subr.bf16.mxu0 0
        %1373 = vmatpush2.bf16.xpose.msra.mxu0 0
        %1374 = vmatprep.subr.bf16.mxu0 0
        %1375 = vmatpush2.bf16.xpose.msra.mxu0 0
        %1376 = vmatprep.subr.bf16.mxu0 0
        %1377 = vmatpush2.bf16.xpose.msra.mxu0 0
        %1378 = vmatprep.subr.bf16.mxu0 0
        %1379 = vmatpush2.bf16.xpose.msra.mxu0 0
        %1380 = vmatprep.subr.bf16.mxu0 0
        %1381 = vmatpush2.bf16.xpose.msra.mxu0 0
        %1382 = vmatprep.subr.bf16.mxu0 0
        %1383 = vmatpush2.bf16.xpose.msra.mxu0 0
        %1384 = vmatprep.subr.bf16.mxu0 0
        %1385 = vmatpush2.bf16.xpose.msra.mxu0 0
        %1386 = vmatprep.mubr.bf16.mxu0 0
        %1387 = vmatmul.mubr.bf16.gmra.mxu0 %v1346
        %v1388 = vpop.f32.mrf.mxu0
        %v1389 = vadd.f32 %v223, %v1388
        %v1390 = vpop.f32.mrf.mxu0
        %v1391 = vpop.f32.mrf.mxu0
        %v1392 = vpop.f32.mrf.mxu0
        %1393 = vdwg.mxu0
        %v1394 = vsel %vm280, %v1389, -inf
        %1395 = vmax.xlane.f32.xlu0 %v1394
        %v1396 = vpop.xlane.xlu0 %1395
        %v1397 = vsub.f32 %v1389, %v1396
        %v1398 = vmul.f32 %v1397, 1.442695
        %v1399 = vpow.pop %v1398
        %v1400 = vpack.c.bf16 %v1399, %v1399
        %v1402 = vsel %vm280, %v1400, 0
        %1404 = vmatprep.subr.bf16.mxu0 0
        %1405 = vmatpush1.bf16.msra.mxu0 0
        %1406 = vmatprep.subr.bf16.mxu0 0
        %1407 = vmatpush1.bf16.msra.mxu0 0
        %1408 = vmatprep.subr.bf16.mxu0 0
        %1409 = vmatpush1.bf16.msra.mxu0 0
        %1410 = vmatprep.subr.bf16.mxu0 0
        %1411 = vmatpush1.bf16.msra.mxu0 0
        %1412 = vmatprep.subr.bf16.mxu0 0
        %1413 = vmatpush1.bf16.msra.mxu0 0
        %1414 = vmatprep.subr.bf16.mxu0 0
        %1415 = vmatpush1.bf16.msra.mxu0 0
        %1416 = vmatprep.subr.bf16.mxu0 0
        %1417 = vmatpush1.bf16.msra.mxu0 %v669
        %1418 = vmatprep.subr.bf16.mxu0 0
        %1419 = vmatpush1.bf16.msra.mxu0 %v668
        %1420 = vmatprep.subr.bf16.mxu0 0
        %1421 = vmatpush2.bf16.msra.mxu0 0
        %1422 = vmatprep.subr.bf16.mxu0 0
        %1423 = vmatpush2.bf16.msra.mxu0 0
        %1424 = vmatprep.subr.bf16.mxu0 0
        %1425 = vmatpush2.bf16.msra.mxu0 0
        %1426 = vmatprep.subr.bf16.mxu0 0
        %1427 = vmatpush2.bf16.msra.mxu0 0
        %1428 = vmatprep.subr.bf16.mxu0 0
        %1429 = vmatpush2.bf16.msra.mxu0 0
        %1430 = vmatprep.subr.bf16.mxu0 0
        %1431 = vmatpush2.bf16.msra.mxu0 0
        %1432 = vmatprep.subr.bf16.mxu0 0
        %1433 = vmatpush2.bf16.msra.mxu0 0
        %1434 = vmatprep.subr.bf16.mxu0 0
        %1435 = vmatpush2.bf16.msra.mxu0 0
        %1436 = vmatprep.mubr.bf16.mxu0 0
        %1437 = vmatmul.mubr.bf16.gmra.mxu0 %v1402
        %v1438 = vpop.f32.mrf.mxu0
        %v1439 = vadd.f32 0.0, %v1438
        %v1440 = vpop.f32.mrf.mxu0
        %v1441 = vpop.f32.mrf.mxu0
        %v1442 = vpop.f32.mrf.mxu0
        %1443 = vdwg.mxu0
        %v1444 = vmax.f32 %v1439, 1e-20
        %v1445 = vrcp.pop %v1444
        %v1446 = vmul.f32 %v1399, %v1445
        %v1447 = vpack.c.bf16 %v1446, %v1446
        %v1449 = vsel %vm280, %v1447, 0
        %1451 = vmatprep.subr.bf16.mxu0 0
        %1452 = vmatpush1.bf16.msra.mxu0 0
        %1453 = vmatprep.subr.bf16.mxu0 0
        %1454 = vmatpush1.bf16.msra.mxu0 0
        %1455 = vmatprep.subr.bf16.mxu0 0
        %1456 = vmatpush1.bf16.msra.mxu0 0
        %1457 = vmatprep.subr.bf16.mxu0 0
        %1458 = vmatpush1.bf16.msra.mxu0 0
        %1459 = vmatprep.subr.bf16.mxu0 0
        %1460 = vmatpush1.bf16.msra.mxu0 0
        %1461 = vmatprep.subr.bf16.mxu0 0
        %1462 = vmatpush1.bf16.msra.mxu0 0
        %1463 = vmatprep.subr.bf16.mxu0 0
        %1464 = vmatpush1.bf16.msra.mxu0 %v1344
        %1465 = vmatprep.subr.bf16.mxu0 0
        %1466 = vmatpush1.bf16.msra.mxu0 %v1343
        %1467 = vmatprep.subr.bf16.mxu0 0
        %1468 = vmatpush2.bf16.msra.mxu0 0
        %1469 = vmatprep.subr.bf16.mxu0 0
        %1470 = vmatpush2.bf16.msra.mxu0 0
        %1471 = vmatprep.subr.bf16.mxu0 0
        %1472 = vmatpush2.bf16.msra.mxu0 0
        %1473 = vmatprep.subr.bf16.mxu0 0
        %1474 = vmatpush2.bf16.msra.mxu0 0
        %1475 = vmatprep.subr.bf16.mxu0 0
        %1476 = vmatpush2.bf16.msra.mxu0 0
        %1477 = vmatprep.subr.bf16.mxu0 0
        %1478 = vmatpush2.bf16.msra.mxu0 0
        %1479 = vmatprep.subr.bf16.mxu0 0
        %1480 = vmatpush2.bf16.msra.mxu0 0
        %1481 = vmatprep.subr.bf16.mxu0 0
        %1482 = vmatpush2.bf16.msra.mxu0 0
        %1483 = vmatprep.mubr.bf16.mxu0 0
        %1484 = vmatmul.mubr.bf16.gmra.mxu0 %v1449
        %v1485 = vpop.f32.mrf.mxu0
        %v1486 = vadd.f32 0.0, %v1485
        %v1487 = vpop.f32.mrf.mxu0
        %v1488 = vpop.f32.mrf.mxu0
        %v1489 = vpop.f32.mrf.mxu0
        %1490 = vdwg.mxu0
        %v1491 = vpack.c.bf16 %v1486, %v1486
        %v1492 = vlaneseq
        %v1493 = vshrl.u32 %v1492, 7
        %v1494 = vsub.s32 0, %v1493
        %v1495 = vrot.slane %v1038, %v1494
        %v1500 = vunpack.c.l.b16 %v1011
        %v1501 = vunpack.c.l.b16 %v1012
        %v1502 = vunpack.c.l.b16 %v1013
        %v1503 = vunpack.c.l.b16 %v1014
        %v1504 = vpack.c.b16 %v1501, %v1500
        %v1505 = vpack.c.b16 %v1503, %v1502
        %v1509 = vsel %vm280, %v1491, 0
        %1511 = vmatprep.subr.bf16.mxu0 0
        %1512 = vmatpush1.bf16.msra.mxu0 0
        %1513 = vmatprep.subr.bf16.mxu0 0
        %1514 = vmatpush1.bf16.msra.mxu0 0
        %1515 = vmatprep.subr.bf16.mxu0 0
        %1516 = vmatpush1.bf16.msra.mxu0 0
        %1517 = vmatprep.subr.bf16.mxu0 0
        %1518 = vmatpush1.bf16.msra.mxu0 0
        %1519 = vmatprep.subr.bf16.mxu0 0
        %1520 = vmatpush1.bf16.msra.mxu0 0
        %1521 = vmatprep.subr.bf16.mxu0 0
        %1522 = vmatpush1.bf16.msra.mxu0 0
        %1523 = vmatprep.subr.bf16.mxu0 0
        %1524 = vmatpush1.bf16.msra.mxu0 %v1505
        %1525 = vmatprep.subr.bf16.mxu0 0
        %1526 = vmatpush1.bf16.msra.mxu0 %v1504
        %1527 = vmatprep.subr.bf16.mxu0 0
        %1528 = vmatpush2.bf16.msra.mxu0 0
        %1529 = vmatprep.subr.bf16.mxu0 0
        %1530 = vmatpush2.bf16.msra.mxu0 0
        %1531 = vmatprep.subr.bf16.mxu0 0
        %1532 = vmatpush2.bf16.msra.mxu0 0
        %1533 = vmatprep.subr.bf16.mxu0 0
        %1534 = vmatpush2.bf16.msra.mxu0 0
        %1535 = vmatprep.subr.bf16.mxu0 0
        %1536 = vmatpush2.bf16.msra.mxu0 0
        %1537 = vmatprep.subr.bf16.mxu0 0
        %1538 = vmatpush2.bf16.msra.mxu0 0
        %1539 = vmatprep.subr.bf16.mxu0 0
        %1540 = vmatpush2.bf16.msra.mxu0 0
        %1541 = vmatprep.subr.bf16.mxu0 0
        %1542 = vmatpush2.bf16.msra.mxu0 0
        %1543 = vmatprep.mubr.bf16.mxu0 0
        %1544 = vmatmul.mubr.bf16.gmra.mxu0 %v1509
        %v1545 = vpop.f32.mrf.mxu0
        %v1546 = vadd.f32 %v1495, %v1545
        %v1547 = vpop.f32.mrf.mxu0
        %v1548 = vpop.f32.mrf.mxu0
        %v1549 = vpop.f32.mrf.mxu0
        %1550 = vdwg.mxu0
        %v1551 = vadd.f32 %v998, %v1546
        %v1552 = vsel %vm280, %v1551, 0.0
        %1553 = vadd.xlane.f32.xlu0 %v1552
        %v1554 = vpop.xlane.xlu0 %1553
        %v1555 = vmul.f32 %v1554, %v284
        %v1556 = vsub.f32 %v1551, %v1555
        %v1557 = vmul.f32 %v1556, %v1556
        %v1558 = vsel %vm280, %v1557, 0.0
        %1559 = vadd.xlane.f32.xlu0 %v1558
        %v1560 = vpop.xlane.xlu0 %1559
        %v1561 = vmul.f32 %v1560, %v284
        %v1562 = vadd.f32 %v1561, 1e-05
        %v1563 = vrsqrt.pop %v1562
        %v1564 = vmul.f32 %v1556, %v1563
        %v1565 = vpack.c.bf16 %v1564, %v1564
        %v1566 = vlaneseq
        %v1567 = vshrl.u32 %v1566, 7
        %v1568 = vsub.s32 0, %v1567
        %v1569 = vrot.slane %v1039, %v1568
        %v1574 = vunpack.c.l.b16 %v1015
        %v1575 = vunpack.c.l.b16 %v1016
        %v1576 = vunpack.c.l.b16 %v1017
        %v1577 = vunpack.c.l.b16 %v1018
        %v1578 = vpack.c.b16 %v1575, %v1574
        %v1579 = vpack.c.b16 %v1577, %v1576
        %v1583 = vsel %vm280, %v1565, 0
        %1585 = vmatprep.subr.bf16.mxu0 0
        %1586 = vmatpush1.bf16.msra.mxu0 0
        %1587 = vmatprep.subr.bf16.mxu0 0
        %1588 = vmatpush1.bf16.msra.mxu0 0
        %1589 = vmatprep.subr.bf16.mxu0 0
        %1590 = vmatpush1.bf16.msra.mxu0 0
        %1591 = vmatprep.subr.bf16.mxu0 0
        %1592 = vmatpush1.bf16.msra.mxu0 0
        %1593 = vmatprep.subr.bf16.mxu0 0
        %1594 = vmatpush1.bf16.msra.mxu0 0
        %1595 = vmatprep.subr.bf16.mxu0 0
        %1596 = vmatpush1.bf16.msra.mxu0 0
        %1597 = vmatprep.subr.bf16.mxu0 0
        %1598 = vmatpush1.bf16.msra.mxu0 %v1579
        %1599 = vmatprep.subr.bf16.mxu0 0
        %1600 = vmatpush1.bf16.msra.mxu0 %v1578
        %1601 = vmatprep.subr.bf16.mxu0 0
        %1602 = vmatpush2.bf16.msra.mxu0 0
        %1603 = vmatprep.subr.bf16.mxu0 0
        %1604 = vmatpush2.bf16.msra.mxu0 0
        %1605 = vmatprep.subr.bf16.mxu0 0
        %1606 = vmatpush2.bf16.msra.mxu0 0
        %1607 = vmatprep.subr.bf16.mxu0 0
        %1608 = vmatpush2.bf16.msra.mxu0 0
        %1609 = vmatprep.subr.bf16.mxu0 0
        %1610 = vmatpush2.bf16.msra.mxu0 0
        %1611 = vmatprep.subr.bf16.mxu0 0
        %1612 = vmatpush2.bf16.msra.mxu0 0
        %1613 = vmatprep.subr.bf16.mxu0 0
        %1614 = vmatpush2.bf16.msra.mxu0 0
        %1615 = vmatprep.subr.bf16.mxu0 0
        %1616 = vmatpush2.bf16.msra.mxu0 0
        %1617 = vmatprep.mubr.bf16.mxu0 0
        %1618 = vmatmul.mubr.bf16.gmra.mxu0 %v1583
        %v1619 = vpop.f32.mrf.mxu0
        %v1620 = vadd.f32 %v1569, %v1619
        %v1621 = vpop.f32.mrf.mxu0
        %v1622 = vpop.f32.mrf.mxu0
        %v1623 = vpop.f32.mrf.mxu0
        %1624 = vdwg.mxu0
        %v1625 = vmul.f32 %v1620, 1.702
        %v1626 = vxor.u32 %v1625, 2147483648
        %v1627 = vmul.f32 %v1626, 1.442695
        %v1628 = vpow.pop %v1627
        %v1629 = vadd.f32 %v1628, 1.0
        %v1630 = vrcp.pop %v1629
        %v1631 = vmul.f32 1.0, %v1630
        %v1632 = vmul.f32 %v1620, %v1631
        %v1633 = vpack.c.bf16 %v1632, %v1632
        %v1650 = vunpack.c.l.b16 %v1019
        %v1651 = vunpack.c.l.b16 %v1020
        %v1652 = vunpack.c.l.b16 %v1021
        %v1653 = vunpack.c.l.b16 %v1022
        %v1654 = vunpack.c.l.b16 %v1023
        %v1655 = vunpack.c.l.b16 %v1024
        %v1656 = vunpack.c.l.b16 %v1025
        %v1657 = vunpack.c.l.b16 %v1026
        %v1658 = vunpack.c.l.b16 %v1027
        %v1659 = vunpack.c.l.b16 %v1028
        %v1660 = vunpack.c.l.b16 %v1029
        %v1661 = vunpack.c.l.b16 %v1030
        %v1662 = vunpack.c.l.b16 %v1031
        %v1663 = vunpack.c.l.b16 %v1032
        %v1664 = vunpack.c.l.b16 %v1033
        %v1665 = vunpack.c.l.b16 %v1034
        %v1666 = vpack.c.b16 %v1651, %v1650
        %v1667 = vpack.c.b16 %v1653, %v1652
        %v1668 = vpack.c.b16 %v1655, %v1654
        %v1669 = vpack.c.b16 %v1657, %v1656
        %v1670 = vpack.c.b16 %v1659, %v1658
        %v1671 = vpack.c.b16 %v1661, %v1660
        %v1672 = vpack.c.b16 %v1663, %v1662
        %v1673 = vpack.c.b16 %v1665, %v1664
        %1682 = vmatprep.subr.bf16.mxu0 0
        %1683 = vmatpush1.bf16.msra.mxu0 %v1673
        %1684 = vmatprep.subr.bf16.mxu0 0
        %1685 = vmatpush1.bf16.msra.mxu0 %v1672
        %1686 = vmatprep.subr.bf16.mxu0 0
        %1687 = vmatpush1.bf16.msra.mxu0 %v1671
        %1688 = vmatprep.subr.bf16.mxu0 0
        %1689 = vmatpush1.bf16.msra.mxu0 %v1670
        %1690 = vmatprep.subr.bf16.mxu0 0
        %1691 = vmatpush1.bf16.msra.mxu0 %v1669
        %1692 = vmatprep.subr.bf16.mxu0 0
        %1693 = vmatpush1.bf16.msra.mxu0 %v1668
        %1694 = vmatprep.subr.bf16.mxu0 0
        %1695 = vmatpush1.bf16.msra.mxu0 %v1667
        %1696 = vmatprep.subr.bf16.mxu0 0
        %1697 = vmatpush1.bf16.msra.mxu0 %v1666
        %1698 = vmatprep.subr.bf16.mxu0 0
        %1699 = vmatpush2.bf16.msra.mxu0 0
        %1700 = vmatprep.subr.bf16.mxu0 0
        %1701 = vmatpush2.bf16.msra.mxu0 0
        %1702 = vmatprep.subr.bf16.mxu0 0
        %1703 = vmatpush2.bf16.msra.mxu0 0
        %1704 = vmatprep.subr.bf16.mxu0 0
        %1705 = vmatpush2.bf16.msra.mxu0 0
        %1706 = vmatprep.subr.bf16.mxu0 0
        %1707 = vmatpush2.bf16.msra.mxu0 0
        %1708 = vmatprep.subr.bf16.mxu0 0
        %1709 = vmatpush2.bf16.msra.mxu0 0
        %1710 = vmatprep.subr.bf16.mxu0 0
        %1711 = vmatpush2.bf16.msra.mxu0 0
        %1712 = vmatprep.subr.bf16.mxu0 0
        %1713 = vmatpush2.bf16.msra.mxu0 0
        %1714 = vmatprep.mubr.bf16.mxu0 0
        %1715 = vmatmul.mubr.bf16.gmra.mxu0 %v1633
        %v1716 = vpop.f32.mrf.mxu0
        %v1717 = vadd.f32 0.0, %v1716
        %v1718 = vpop.f32.mrf.mxu0
        %v1719 = vpop.f32.mrf.mxu0
        %v1720 = vpop.f32.mrf.mxu0
        %1721 = vdwg.mxu0
        %v1722 = vadd.f32 %v1551, %v1717
        %v1723 = vlaneseq
        %v1724 = vshrl.u32 %v1723, 7
        %v1725 = vsub.s32 0, %v1724
        %v1726 = vrot.slane %v1040, %v1725
        %v1727 = vadd.f32 %v1722, %v1726
        %v1728 = vsel %vm280, %v1727, 0.0
        %1729 = vadd.xlane.f32.xlu0 %v1728
        %v1730 = vpop.xlane.xlu0 %1729
        %v1731 = vmul.f32 %v1730, %v284
        %v1732 = vsub.f32 %v1727, %v1731
        %v1733 = vmul.f32 %v1732, %v1732
        %v1734 = vsel %vm280, %v1733, 0.0
        %1735 = vadd.xlane.f32.xlu0 %v1734
        %v1736 = vpop.xlane.xlu0 %1735
        %v1737 = vmul.f32 %v1736, %v284
        %v1738 = vadd.f32 %v1737, 1e-05
        %v1739 = vrsqrt.pop %v1738
        %v1740 = vmul.f32 %v1732, %v1739
        %v1741 = vpack.c.bf16 %v1740, %v1740
        %s1742 = sld [smem:[#allocation3 + %s28]]
        %v1743 = vlaneseq
        %v1744 = vand.u32 %v1743, 127
        %v1745 = vstv %s1742
        %vm1746 = vcmp.eq.s32.totalorder %v1744, %v1745
        %v1747 = vsel %vm1746, 1, 0
        %v1748 = vcvt.s32.f32 %v1747
        %v1749 = vpack.c.bf16 %v1748, %v1748
        %v1751 = vsel %vm480, %v1749, 0
        %v1754 = vsel %vm487, %v1741, 0
        %1756 = vmatprep.subr.bf16.mxu0 0
        %1757 = vmatpush1.bf16.msra.mxu0 0
        %1758 = vmatprep.subr.bf16.mxu0 0
        %1759 = vmatpush1.bf16.msra.mxu0 0
        %1760 = vmatprep.subr.bf16.mxu0 0
        %1761 = vmatpush1.bf16.msra.mxu0 0
        %1762 = vmatprep.subr.bf16.mxu0 0
        %1763 = vmatpush1.bf16.msra.mxu0 0
        %1764 = vmatprep.subr.bf16.mxu0 0
        %1765 = vmatpush1.bf16.msra.mxu0 0
        %1766 = vmatprep.subr.bf16.mxu0 0
        %1767 = vmatpush1.bf16.msra.mxu0 0
        %1768 = vmatprep.subr.bf16.mxu0 0
        %1769 = vmatpush1.bf16.msra.mxu0 0
        %1770 = vmatprep.subr.bf16.mxu0 0
        %1771 = vmatpush1.bf16.msra.mxu0 %v1754
        %1772 = vmatprep.subr.bf16.mxu0 0
        %1773 = vmatpush2.bf16.msra.mxu0 0
        %1774 = vmatprep.subr.bf16.mxu0 0
        %1775 = vmatpush2.bf16.msra.mxu0 0
        %1776 = vmatprep.subr.bf16.mxu0 0
        %1777 = vmatpush2.bf16.msra.mxu0 0
        %1778 = vmatprep.subr.bf16.mxu0 0
        %1779 = vmatpush2.bf16.msra.mxu0 0
        %1780 = vmatprep.subr.bf16.mxu0 0
        %1781 = vmatpush2.bf16.msra.mxu0 0
        %1782 = vmatprep.subr.bf16.mxu0 0
        %1783 = vmatpush2.bf16.msra.mxu0 0
        %1784 = vmatprep.subr.bf16.mxu0 0
        %1785 = vmatpush2.bf16.msra.mxu0 0
        %1786 = vmatprep.subr.bf16.mxu0 0
        %1787 = vmatpush2.bf16.msra.mxu0 0
        %1788 = vmatprep.mubr.bf16.mxu0 0
        %1789 = vmatmul.mubr.bf16.gmra.mxu0 %v1751
        %v1790 = vpop.f32.mrf.mxu0
        %v1791 = vadd.f32 0.0, %v1790
        %v1792 = vpop.f32.mrf.mxu0
        %v1793 = vpop.f32.mrf.mxu0
        %v1794 = vpop.f32.mrf.mxu0
        %1795 = vdwg.mxu0
        %v1796 = vld [vmem:[#allocation7 + $0x120] sm:$0xf]
        %v1797 = vld [vmem:[#allocation7 + $0x124] sm:$0xf]
        %v1798 = vld [vmem:[#allocation7 + $0x128] sm:$0xf]
        %v1799 = vld [vmem:[#allocation7 + $0x12c] sm:$0xf]
        %v1800 = vld [vmem:[#allocation9 + $0x40] sm:$0x1]
        %v1801 = vpack.c.bf16 %v1791, %v1791
        %v1806 = vunpack.c.l.b16 %v1796
        %v1807 = vunpack.c.l.b16 %v1797
        %v1808 = vunpack.c.l.b16 %v1798
        %v1809 = vunpack.c.l.b16 %v1799
        %v1810 = vpack.c.b16 %v1807, %v1806
        %v1811 = vpack.c.b16 %v1809, %v1808
        %v1815 = vsel %vm280, %v1801, 0
        %1817 = vmatprep.subr.bf16.mxu0 0
        %1818 = vmatpush1.bf16.msra.mxu0 0
        %1819 = vmatprep.subr.bf16.mxu0 0
        %1820 = vmatpush1.bf16.msra.mxu0 0
        %1821 = vmatprep.subr.bf16.mxu0 0
        %1822 = vmatpush1.bf16.msra.mxu0 0
        %1823 = vmatprep.subr.bf16.mxu0 0
        %1824 = vmatpush1.bf16.msra.mxu0 0
        %1825 = vmatprep.subr.bf16.mxu0 0
        %1826 = vmatpush1.bf16.msra.mxu0 0
        %1827 = vmatprep.subr.bf16.mxu0 0
        %1828 = vmatpush1.bf16.msra.mxu0 0
        %1829 = vmatprep.subr.bf16.mxu0 0
        %1830 = vmatpush1.bf16.msra.mxu0 %v1811
        %1831 = vmatprep.subr.bf16.mxu0 0
        %1832 = vmatpush1.bf16.msra.mxu0 %v1810
        %1833 = vmatprep.subr.bf16.mxu0 0
        %1834 = vmatpush2.bf16.msra.mxu0 0
        %1835 = vmatprep.subr.bf16.mxu0 0
        %1836 = vmatpush2.bf16.msra.mxu0 0
        %1837 = vmatprep.subr.bf16.mxu0 0
        %1838 = vmatpush2.bf16.msra.mxu0 0
        %1839 = vmatprep.subr.bf16.mxu0 0
        %1840 = vmatpush2.bf16.msra.mxu0 0
        %1841 = vmatprep.subr.bf16.mxu0 0
        %1842 = vmatpush2.bf16.msra.mxu0 0
        %1843 = vmatprep.subr.bf16.mxu0 0
        %1844 = vmatpush2.bf16.msra.mxu0 0
        %1845 = vmatprep.subr.bf16.mxu0 0
        %1846 = vmatpush2.bf16.msra.mxu0 0
        %1847 = vmatprep.subr.bf16.mxu0 0
        %1848 = vmatpush2.bf16.msra.mxu0 0
        %1849 = vmatprep.mubr.bf16.mxu0 0
        %1850 = vmatmul.mubr.bf16.gmra.mxu0 %v1815
        %v1851 = vpop.f32.mrf.mxu0
        %v1852 = vadd.f32 %v1800, %v1851
        %v1853 = vpop.f32.mrf.mxu0
        %v1854 = vpop.f32.mrf.mxu0
        %v1855 = vpop.f32.mrf.mxu0
        %1856 = vdwg.mxu0
        %1857 = vst [vmem:[%s220] sm:$0x1] %v1852
        %s1858 = sand.u32 %s104, 1
        %s1859 = scalar_lea.sflag [#allocation6], %s1858
        %s1860 = sand.u32 %s104, 1
        %s1861 = scalar_lea.vmem [#allocation10], %s1860
        // Predicated region
        $region45: #{text_encoder.1} parent=31 // pred_check
          %p1862 = pneg %p114
        $region46: #{text_encoder.1} parent=31 // pred_check_branch
          %1864 = sbr.rel (%p1862) target = $region48
        $region47: #{text_encoder.1} parent=31 // pred_region
          %s1866 = ssub.s32 16, 16
          %1867 = vsyncadd %s1859, %s1866
          %s1868 = smul.addr %s28, 16
          %s1869 = scalar_lea.hbm %s4, %s1868
          %s1871 = sshll.u32 %s1861, 4
          %s1872 = int_to_ptr.vmem [resolvable:$true] %s1871
          %1874 = dma.vmem_to_hbm [thread:$0]  %s1872, 16, %s1869, %s1859
        $region48: #{text_encoder.1} parent=31 // pred_fallthru
          _
      $region32: #{text_encoder.1} parent=5 // pred_fallthru
        _
      %p1875 = scmp.le.s32.totalorder 2, %s23
      // Predicated region
      $region49: #{text_encoder.1} parent=5 // pred_check
        %p1876 = pneg %p1875
      $region50: #{text_encoder.1} parent=5 // pred_check_branch
        %1878 = sbr.rel (%p1876) target = $region52
      $region51: #{text_encoder.1} parent=5 // pred_region
        %s1879 = ssub.s32 %s23, 2
        // Predicated region
        $region53: #{text_encoder.1} parent=51 // pred_check
          %p1880 = pneg %p120
        $region54: #{text_encoder.1} parent=51 // pred_check_branch
          %1882 = sbr.rel (%p1880) target = $region56
        $region55: #{text_encoder.1} parent=51 // pred_region
          %s1883 = sand.u32 %s105, 1
          %s1884 = scalar_lea.sflag [#allocation6], %s1883
          %s1885 = sand.u32 %s105, 1
          %s1886 = scalar_lea.vmem [#allocation10], %s1885
          %1887 = dma.done %s1884, 16
        $region56: #{text_encoder.1} parent=51 // pred_fallthru
          _
      $region52: #{text_encoder.1} parent=5 // pred_fallthru
        _
    $region6: #{text_encoder.1} parent=1 // loop_footer
      %s27 = sadd.s32 1, %s23
    $region7: #{text_encoder.1} parent=1 // loop_footer_branch
      %22 = sbr.rel target = $region3
    $region8: #{text_encoder.1} parent=1 // loop_exit
      _
    %1888 = vsyncpa [#allocation5], 1
    %s1889 = scalar_lea.sflag [#allocation5], 1
    %1890 = vsyncpa %s1889, 1
    %1891 = vsyncpa [#allocation8], 1
    %1892 = vsyncpa [#allocation6], 1
    %s1893 = scalar_lea.sflag [#allocation6], 1
    %1894 = vsyncpa %s1893, 1

</llo_original>
